<compile_context>
chip_gen: v5e
topology: v5e:2x2
jax: 0.10.0
libtpu: 0.0.40
codegen_flags: <defaults>
</compile_context>

<pallas_src>
import math
from functools import partial

import jax
import jax.numpy as jnp
from jax import lax
from jax.experimental import pallas as pl
from jax.experimental.pallas import tpu as pltpu


# --------------------------------------------------------------------------
# Kernel 1: fused QKV projection + RMSNorm + RoPE (sequence-tiled)
# --------------------------------------------------------------------------
def _qkv_rope_kernel(x_ref, wq_ref, bq_ref, wk_ref, bk_ref, wv_ref, bv_ref,
                     gq_ref, gk_ref, cos_ref, sin_ref,
                     q_ref, k_ref, v_ref, *, eps):
    x = x_ref[0]                                        # (ts, D), native dtype

    def linear(w_ref, b_ref):
        # native-dtype MXU operands, f32 accumulation
        return (jnp.dot(x, w_ref[...], preferred_element_type=jnp.float32)
                + b_ref[...].astype(jnp.float32))       # (ts, D) f32

    def rms_norm(t, g_ref):
        ms = jnp.mean(t * t, axis=-1, keepdims=True)
        return t * lax.rsqrt(ms + eps) * g_ref[...].astype(jnp.float32)

    q = rms_norm(linear(wq_ref, bq_ref), gq_ref)
    k = rms_norm(linear(wk_ref, bk_ref), gk_ref)
    v = linear(wv_ref, bv_ref)

    # RoPE in de-interleaved column order ([all re | all im] per head):
    #   out_re = re*cos - im*sin ; out_im = im*cos + re*sin
    # => out = t * cos + roll(t, D//2) * sin_signed
    # (roll by D//2 swaps the re/im halves; symmetric, so rotate direction is
    # irrelevant).  No MXU work, only XLU/VPU slots.
    # TODO(synk): torch rope_apply upcasts to float64/complex128; TPU has no
    # f64, so the rotation is computed in float32.
    D = q.shape[-1]
    cos = cos_ref[...].astype(jnp.float32)              # (ts, D)
    sin = sin_ref[...].astype(jnp.float32)              # (ts, D), signed

    def rope(t):
        return t * cos + pltpu.roll(t, D // 2, axis=1) * sin

    q_ref[0] = rope(q).astype(q_ref.dtype)
    k_ref[0] = rope(k).astype(k_ref.dtype)
    v_ref[0] = v.astype(v_ref.dtype)


# --------------------------------------------------------------------------
# Kernel 2: flash attention (online softmax), grid (B, H, q tiles, kv tiles)
# --------------------------------------------------------------------------
def _flash_attn_kernel(q_ref, k_ref, v_ref, o_ref, m_sc, l_sc, acc_sc, *, scale):
    ki = pl.program_id(3)

    @pl.when(ki == 0)
    def _():
        m_sc[...] = jnp.full_like(m_sc, -jnp.inf)
        l_sc[...] = jnp.zeros_like(l_sc)
        acc_sc[...] = jnp.zeros_like(acc_sc)

    q = q_ref[0, 0]                                     # (tq, d)
    k = k_ref[0, 0]                                     # (tk, d)
    v = v_ref[0, 0]                                     # (tk, d)

    s = lax.dot_general(q, k, (((1,), (1,)), ((), ())),
                        preferred_element_type=jnp.float32) * scale   # (tq, tk)
    m_prev = m_sc[...]
    m_new = jnp.maximum(m_prev, jnp.max(s, axis=-1, keepdims=True))
    alpha = jnp.exp(m_prev - m_new)
    p = jnp.exp(s - m_new)
    l_sc[...] = alpha * l_sc[...] + jnp.sum(p, axis=-1, keepdims=True)
    acc_sc[...] = alpha * acc_sc[...] + jnp.dot(
        p.astype(v.dtype), v, preferred_element_type=jnp.float32)
    m_sc[...] = m_new

    @pl.when(ki == pl.num_programs(3) - 1)
    def _():
        o_ref[0, 0] = (acc_sc[...] *
                       pl.reciprocal(l_sc[...], approx=True)).astype(o_ref.dtype)


# --------------------------------------------------------------------------
# Kernel 3: output projection (single full-D contraction per sequence tile)
# --------------------------------------------------------------------------
def _out_proj_kernel(a_ref, wo_ref, bo_ref, o_ref):
    a = a_ref[0]                                        # (ts, D)
    o_ref[0] = (jnp.dot(a, wo_ref[...], preferred_element_type=jnp.float32)
                + bo_ref[...].astype(jnp.float32)).astype(o_ref.dtype)


# --------------------------------------------------------------------------
# Wrapper
# --------------------------------------------------------------------------
def self_attention_pallas(x, params, freqs_cos, freqs_sin, *, num_heads,
                          eps=1e-6, seq_tile=None, q_tile=None, kv_tile=None):
    B, S, D = x.shape
    head_dim = D // num_heads
    dh = head_dim // 2

    # De-interleave permutation for Q/K columns: new order = [all re | all im].
    # Per-head QK^T is invariant under a shared column permutation of q and k,
    # so only Wq/Wk (+bias, +RMSNorm gain) are permuted; Wv/Wo stay untouched.
    h_idx = jnp.arange(num_heads)[:, None]
    i_idx = jnp.arange(dh)[None, :]
    re_cols = (h_idx * head_dim + 2 * i_idx).reshape(-1)
    perm = jnp.concatenate([re_cols, re_cols + 1])                      # (D,)

    wq = params["wq"][:, perm]; bq = params["bq"][perm]; gq = params["gq"][perm]
    wk = params["wk"][:, perm]; bk = params["bk"][perm]; gk = params["gk"][perm]
    wv, bv = params["wv"], params["bv"]
    wo, bo = params["wo"], params["bo"]

    # RoPE tables in the de-interleaved order (cos repeated, sin = [-sin|+sin]).
    # TODO(synk): these could stay (S, head_dim//2) and be broadcast per head
    # in-kernel to save HBM bandwidth at very large num_heads.
    cos_full = jnp.tile(freqs_cos, (1, 2 * num_heads)).astype(x.dtype)  # (S, D)
    sin_half = jnp.tile(freqs_sin, (1, num_heads))
    sin_full = jnp.concatenate([-sin_half, sin_half], axis=-1).astype(x.dtype)

    # TODO(synk): for very large D (WanDiT 14B, D=5120) the (D,D) weights should
    # additionally be tiled over D_out (and single-buffered); here they are kept
    # VMEM-resident via a constant index_map.
    ts = seq_tile or min(S, 256)
    tq = q_tile or min(S, 256)
    tk = kv_tile or min(S, 256)
    assert S % ts == 0 and S % tq == 0 and S % tk == 0

    def row(a):
        return a.reshape(1, D)

    # ---- 1) QKV projection + RMSNorm + RoPE, tiled over (batch, sequence) ----
    mat_spec = pl.BlockSpec((D, D), lambda b, s: (0, 0))
    row_spec = pl.BlockSpec((1, D), lambda b, s: (0, 0))
    tab_spec = pl.BlockSpec((ts, D), lambda b, s: (s, 0))
    act_spec = pl.BlockSpec((1, ts, D), lambda b, s: (b, s, 0))
    qkv_shape = jax.ShapeDtypeStruct((B, S, D), x.dtype)

    q, k, v = pl.pallas_call(
        partial(_qkv_rope_kernel, eps=eps),
        out_shape=(qkv_shape, qkv_shape, qkv_shape),
        grid=(B, S // ts),
        in_specs=[act_spec,
                  mat_spec, row_spec,        # q proj
                  mat_spec, row_spec,        # k proj
                  mat_spec, row_spec,        # v proj
                  row_spec, row_spec,        # norm_q / norm_k gains
                  tab_spec, tab_spec],       # rope cos / signed sin
        out_specs=(act_spec, act_spec, act_spec),
        compiler_params=pltpu.CompilerParams(
            dimension_semantics=("parallel", "parallel")),
    )(x, wq, row(bq), wk, row(bk), wv, row(bv), row(gq), row(gk),
      cos_full, sin_full)

    # ---- XLA glue: (B,S,D) -> (B,H,S,head_dim) per-head layout --------------
    # q/k are in de-interleaved column order -> per-head [re | im]; identical
    # for q and k, so per-head dot products match the original module.
    def split_heads_deint(t):
        return (t.reshape(B, S, 2, num_heads, dh)
                 .transpose(0, 3, 1, 2, 4).reshape(B, num_heads, S, head_dim))

    def split_heads(t):
        return t.reshape(B, S, num_heads, head_dim).transpose(0, 2, 1, 3)

    q4, k4, v4 = split_heads_deint(q), split_heads_deint(k), split_heads(v)

    # ---- 2) flash attention ---------------------------------------------------
    q_spec = pl.BlockSpec((1, 1, tq, head_dim), lambda b, h, qi, ki: (b, h, qi, 0))
    kv_spec = pl.BlockSpec((1, 1, tk, head_dim), lambda b, h, qi, ki: (b, h, ki, 0))

    attn4 = pl.pallas_call(
        partial(_flash_attn_kernel, scale=1.0 / math.sqrt(head_dim)),
        out_shape=jax.ShapeDtypeStruct((B, num_heads, S, head_dim), x.dtype),
        grid=(B, num_heads, S // tq, S // tk),
        in_specs=[q_spec, kv_spec, kv_spec],
        out_specs=q_spec,
        scratch_shapes=[pltpu.VMEM((tq, 1), jnp.float32),
                        pltpu.VMEM((tq, 1), jnp.float32),
                        pltpu.VMEM((tq, head_dim), jnp.float32)],
        compiler_params=pltpu.CompilerParams(
            dimension_semantics=("parallel", "parallel", "parallel", "arbitrary")),
    )(q4, k4, v4)

    # ---- XLA glue: back to (B,S,D); heads concatenated in v's original order --
    attn = attn4.transpose(0, 2, 1, 3).reshape(B, S, D)

    # ---- 3) output projection -------------------------------------------------
    return pl.pallas_call(
        _out_proj_kernel,
        out_shape=jax.ShapeDtypeStruct((B, S, D), x.dtype),
        grid=(B, S // ts),
        in_specs=[act_spec, mat_spec, row_spec],
        out_specs=act_spec,
        compiler_params=pltpu.CompilerParams(
            dimension_semantics=("parallel", "parallel")),
    )(attn, wo, row(bo))


# --------------------------------------------------------------------------
# Pure-JAX reference mirroring the PyTorch forward
# --------------------------------------------------------------------------
def self_attention_ref(x, params, freqs_cos, freqs_sin, *, num_heads, eps=1e-6):
    B, S, D = x.shape
    d = D // num_heads
    f32 = jnp.float32
    xf = x.astype(f32)
    wq, bq = params["wq"].astype(f32), params["bq"].astype(f32)
    wk, bk = params["wk"].astype(f32), params["bk"].astype(f32)
    wv, bv = params["wv"].astype(f32), params["bv"].astype(f32)
    wo, bo = params["wo"].astype(f32), params["bo"].astype(f32)
    gq, gk = params["gq"].astype(f32), params["gk"].astype(f32)

    def rms(t, g):
        return t * lax.rsqrt(jnp.mean(t * t, -1, keepdims=True) + eps) * g

    q = rms(xf @ wq + bq, gq).reshape(B, S, num_heads, d)
    k = rms(xf @ wk + bk, gk).reshape(B, S, num_heads, d)
    v = (xf @ wv + bv).reshape(B, S, num_heads, d)

    def rope(t):
        tr = t.reshape(B, S, num_heads, d // 2, 2)
        re, im = tr[..., 0], tr[..., 1]
        c = freqs_cos.astype(f32)[None, :, None, :]
        s = freqs_sin.astype(f32)[None, :, None, :]
        return jnp.stack([re * c - im * s, re * s + im * c], -1).reshape(
            B, S, num_heads, d)

    q, k = rope(q), rope(k)
    att = jnp.einsum("bsnd,btnd->bnst", q, k) / math.sqrt(d)
    att = jax.nn.softmax(att, axis=-1)
    out = jnp.einsum("bnst,btnd->bsnd", att, v).reshape(B, S, D)
    return out @ wo + bo


def _make_inputs(key, B, S, dim, num_heads, dtype):
    head_dim = dim // num_heads
    ks = jax.random.split(key, 12)

    def mk(k, shape, scale=1.0):
        return (jax.random.normal(k, shape, jnp.float32) * scale).astype(dtype)

    w_scale = 1.0 / math.sqrt(dim)
    params = dict(
        wq=mk(ks[0], (dim, dim), w_scale), bq=mk(ks[1], (dim,), 0.1),
        wk=mk(ks[2], (dim, dim), w_scale), bk=mk(ks[3], (dim,), 0.1),
        wv=mk(ks[4], (dim, dim), w_scale), bv=mk(ks[5], (dim,), 0.1),
        wo=mk(ks[6], (dim, dim), w_scale), bo=mk(ks[7], (dim,), 0.1),
        gq=(1.0 + 0.1 * jax.random.normal(ks[8], (dim,))).astype(dtype),
        gk=(1.0 + 0.1 * jax.random.normal(ks[9], (dim,))).astype(dtype),
    )
    x = mk(ks[10], (B, S, dim), 1.0)
    theta = jax.random.uniform(ks[11], (S, head_dim // 2), jnp.float32,
                               minval=-math.pi, maxval=math.pi)
    return x, params, jnp.cos(theta), jnp.sin(theta)


if __name__ == "__main__":
    fwd = jax.jit(self_attention_pallas,
                  static_argnames=("num_heads", "eps", "seq_tile",
                                   "q_tile", "kv_tile"))

    # Small test (blocks equal full array dims).
    B, S, dim, heads = 2, 8, 128, 4
    x, params, fc, fs = _make_inputs(jax.random.PRNGKey(0), B, S, dim, heads,
                                     jnp.float32)
    out = jax.block_until_ready(fwd(x, params, fc, fs, num_heads=heads))
    ref = self_attention_ref(x, params, fc, fs, num_heads=heads)
    assert out.shape == (B, S, dim)
    if not jnp.allclose(out.astype(jnp.float32), ref, atol=2e-2, rtol=2e-2):
        raise AssertionError(
            "small f32 mismatch, max abs err = "
            f"{float(jnp.max(jnp.abs(out.astype(jnp.float32) - ref)))}")

    # Realistically tiled bf16 test: multi-tile grids, 128-aligned blocks.
    B, S, dim, heads = 1, 256, 256, 2
    x, params, fc, fs = _make_inputs(jax.random.PRNGKey(1), B, S, dim, heads,
                                     jnp.bfloat16)
    out = jax.block_until_ready(
        fwd(x, params, fc, fs, num_heads=heads,
            seq_tile=128, q_tile=128, kv_tile=128))
    ref = self_attention_ref(x, params, fc, fs, num_heads=heads)
    if not jnp.allclose(out.astype(jnp.float32), ref, atol=5e-2, rtol=5e-2):
        raise AssertionError(
            "tiled bf16 mismatch, max abs err = "
            f"{float(jnp.max(jnp.abs(out.astype(jnp.float32) - ref)))}")

    print("KERNEL_OK")
</pallas_src>

<mosaic_0001>
module attributes {stable_mosaic.version = 11 : i64} {
  func.func @_qkv_rope_kernel(%arg0: i32, %arg1: i32, %arg2: memref<1x8x128xf32, #tpu.memory_space<vmem>>, %arg3: memref<128x128xf32, #tpu.memory_space<vmem>>, %arg4: memref<1x128xf32, #tpu.memory_space<vmem>>, %arg5: memref<128x128xf32, #tpu.memory_space<vmem>>, %arg6: memref<1x128xf32, #tpu.memory_space<vmem>>, %arg7: memref<128x128xf32, #tpu.memory_space<vmem>>, %arg8: memref<1x128xf32, #tpu.memory_space<vmem>>, %arg9: memref<1x128xf32, #tpu.memory_space<vmem>>, %arg10: memref<1x128xf32, #tpu.memory_space<vmem>>, %arg11: memref<8x128xf32, #tpu.memory_space<vmem>>, %arg12: memref<8x128xf32, #tpu.memory_space<vmem>>, %arg13: memref<1x8x128xf32, #tpu.memory_space<vmem>>, %arg14: memref<1x8x128xf32, #tpu.memory_space<vmem>>, %arg15: memref<1x8x128xf32, #tpu.memory_space<vmem>>) attributes {dimension_semantics = [#tpu.dimension_semantics<parallel>, #tpu.dimension_semantics<parallel>], iteration_bounds = array<i64: 2, 1>, scalar_prefetch = 0 : i64, scratch_operands = 0 : i64, tpu.core_type = #tpu.core_type<tc>, window_params = [{transform_indices = @transform_0, window_bounds = array<i64: 1, 8, 128>}, {pipeline_mode = #tpu.pipeline_mode<synchronous>, transform_indices = @transform_1, window_bounds = array<i64: 128, 128>}, {pipeline_mode = #tpu.pipeline_mode<synchronous>, transform_indices = @transform_2, window_bounds = array<i64: 1, 128>}, {pipeline_mode = #tpu.pipeline_mode<synchronous>, transform_indices = @transform_3, window_bounds = array<i64: 128, 128>}, {pipeline_mode = #tpu.pipeline_mode<synchronous>, transform_indices = @transform_4, window_bounds = array<i64: 1, 128>}, {pipeline_mode = #tpu.pipeline_mode<synchronous>, transform_indices = @transform_5, window_bounds = array<i64: 128, 128>}, {pipeline_mode = #tpu.pipeline_mode<synchronous>, transform_indices = @transform_6, window_bounds = array<i64: 1, 128>}, {pipeline_mode = #tpu.pipeline_mode<synchronous>, transform_indices = @transform_7, window_bounds = array<i64: 1, 128>}, {pipeline_mode = #tpu.pipeline_mode<synchronous>, transform_indices = @transform_8, window_bounds = array<i64: 1, 128>}, {transform_indices = @transform_9, window_bounds = array<i64: 8, 128>}, {transform_indices = @transform_10, window_bounds = array<i64: 8, 128>}, {transform_indices = @transform_11, window_bounds = array<i64: 1, 8, 128>}, {transform_indices = @transform_12, window_bounds = array<i64: 1, 8, 128>}, {transform_indices = @transform_13, window_bounds = array<i64: 1, 8, 128>}]} {
    %c0 = arith.constant 0 : index
    %c0_0 = arith.constant 0 : index
    %c0_1 = arith.constant 0 : index
    %0 = vector.load %arg2[%c0, %c0_0, %c0_1] : memref<1x8x128xf32, #tpu.memory_space<vmem>>, vector<1x8x128xf32>
    %1 = vector.shape_cast %0 : vector<1x8x128xf32> to vector<8x128xf32>
    %c0_2 = arith.constant 0 : index
    %c0_3 = arith.constant 0 : index
    %2 = vector.load %arg3[%c0_2, %c0_3] : memref<128x128xf32, #tpu.memory_space<vmem>>, vector<128x128xf32>
    %cst = arith.constant dense<0.000000e+00> : vector<8x128xf32>
    %3 = tpu.matmul %1, %2, %cst {dimension_numbers = #tpu.dot_dimension_numbers<[1], [0], [0], [1], [0, 0, 1, 1], [], []>} : vector<8x128xf32>, vector<128x128xf32>, vector<8x128xf32> -> vector<8x128xf32>
    %c0_4 = arith.constant 0 : index
    %c0_5 = arith.constant 0 : index
    %4 = vector.load %arg4[%c0_4, %c0_5] : memref<1x128xf32, #tpu.memory_space<vmem>>, vector<1x128xf32>
    %5 = vector.broadcast %4 : vector<1x128xf32> to vector<8x128xf32>
    %6 = arith.addf %3, %5 : vector<8x128xf32>
    %7 = arith.mulf %6, %6 : vector<8x128xf32>
    %cst_6 = arith.constant dense<0.000000e+00> : vector<8xf32>
    %8 = vector.multi_reduction <add>, %7, %cst_6 [1] : vector<8x128xf32> to vector<8xf32>
    %9 = vector.shape_cast %8 : vector<8xf32> to vector<8x1xf32>
    %cst_7 = arith.constant 1.280000e+02 : f32
    %10 = vector.broadcast %cst_7 : f32 to vector<8x1xf32>
    %11 = arith.divf %9, %10 : vector<8x1xf32>
    %cst_8 = arith.constant 9.99999997E-7 : f32
    %12 = vector.broadcast %cst_8 : f32 to vector<8x1xf32>
    %13 = arith.addf %11, %12 : vector<8x1xf32>
    %14 = math.rsqrt %13 : vector<8x1xf32>
    %15 = vector.broadcast %14 : vector<8x1xf32> to vector<8x128xf32>
    %16 = arith.mulf %6, %15 : vector<8x128xf32>
    %c0_9 = arith.constant 0 : index
    %c0_10 = arith.constant 0 : index
    %17 = vector.load %arg9[%c0_9, %c0_10] : memref<1x128xf32, #tpu.memory_space<vmem>>, vector<1x128xf32>
    %18 = vector.broadcast %17 : vector<1x128xf32> to vector<8x128xf32>
    %19 = arith.mulf %16, %18 : vector<8x128xf32>
    %c0_11 = arith.constant 0 : index
    %c0_12 = arith.constant 0 : index
    %20 = vector.load %arg5[%c0_11, %c0_12] : memref<128x128xf32, #tpu.memory_space<vmem>>, vector<128x128xf32>
    %cst_13 = arith.constant dense<0.000000e+00> : vector<8x128xf32>
    %21 = tpu.matmul %1, %20, %cst_13 {dimension_numbers = #tpu.dot_dimension_numbers<[1], [0], [0], [1], [0, 0, 1, 1], [], []>} : vector<8x128xf32>, vector<128x128xf32>, vector<8x128xf32> -> vector<8x128xf32>
    %c0_14 = arith.constant 0 : index
    %c0_15 = arith.constant 0 : index
    %22 = vector.load %arg6[%c0_14, %c0_15] : memref<1x128xf32, #tpu.memory_space<vmem>>, vector<1x128xf32>
    %23 = vector.broadcast %22 : vector<1x128xf32> to vector<8x128xf32>
    %24 = arith.addf %21, %23 : vector<8x128xf32>
    %25 = arith.mulf %24, %24 : vector<8x128xf32>
    %cst_16 = arith.constant dense<0.000000e+00> : vector<8xf32>
    %26 = vector.multi_reduction <add>, %25, %cst_16 [1] : vector<8x128xf32> to vector<8xf32>
    %27 = vector.shape_cast %26 : vector<8xf32> to vector<8x1xf32>
    %cst_17 = arith.constant 1.280000e+02 : f32
    %28 = vector.broadcast %cst_17 : f32 to vector<8x1xf32>
    %29 = arith.divf %27, %28 : vector<8x1xf32>
    %cst_18 = arith.constant 9.99999997E-7 : f32
    %30 = vector.broadcast %cst_18 : f32 to vector<8x1xf32>
    %31 = arith.addf %29, %30 : vector<8x1xf32>
    %32 = math.rsqrt %31 : vector<8x1xf32>
    %33 = vector.broadcast %32 : vector<8x1xf32> to vector<8x128xf32>
    %34 = arith.mulf %24, %33 : vector<8x128xf32>
    %c0_19 = arith.constant 0 : index
    %c0_20 = arith.constant 0 : index
    %35 = vector.load %arg10[%c0_19, %c0_20] : memref<1x128xf32, #tpu.memory_space<vmem>>, vector<1x128xf32>
    %36 = vector.broadcast %35 : vector<1x128xf32> to vector<8x128xf32>
    %37 = arith.mulf %34, %36 : vector<8x128xf32>
    %c0_21 = arith.constant 0 : index
    %c0_22 = arith.constant 0 : index
    %38 = vector.load %arg7[%c0_21, %c0_22] : memref<128x128xf32, #tpu.memory_space<vmem>>, vector<128x128xf32>
    %cst_23 = arith.constant dense<0.000000e+00> : vector<8x128xf32>
    %39 = tpu.matmul %1, %38, %cst_23 {dimension_numbers = #tpu.dot_dimension_numbers<[1], [0], [0], [1], [0, 0, 1, 1], [], []>} : vector<8x128xf32>, vector<128x128xf32>, vector<8x128xf32> -> vector<8x128xf32>
    %c0_24 = arith.constant 0 : index
    %c0_25 = arith.constant 0 : index
    %40 = vector.load %arg8[%c0_24, %c0_25] : memref<1x128xf32, #tpu.memory_space<vmem>>, vector<1x128xf32>
    %41 = vector.broadcast %40 : vector<1x128xf32> to vector<8x128xf32>
    %42 = arith.addf %39, %41 : vector<8x128xf32>
    %c0_26 = arith.constant 0 : index
    %c0_27 = arith.constant 0 : index
    %43 = vector.load %arg11[%c0_26, %c0_27] : memref<8x128xf32, #tpu.memory_space<vmem>>, vector<8x128xf32>
    %c0_28 = arith.constant 0 : index
    %c0_29 = arith.constant 0 : index
    %44 = vector.load %arg12[%c0_28, %c0_29] : memref<8x128xf32, #tpu.memory_space<vmem>>, vector<8x128xf32>
    %45 = arith.mulf %19, %43 : vector<8x128xf32>
    %c64_i32 = arith.constant 64 : i32
    %46 = tpu.dynamic_rotate %19 by %c64_i32 dim 1 : vector<8x128xf32>, i32 -> vector<8x128xf32>
    %47 = arith.mulf %46, %44 : vector<8x128xf32>
    %48 = arith.addf %45, %47 : vector<8x128xf32>
    %c0_30 = arith.constant 0 : index
    %c0_31 = arith.constant 0 : index
    %c0_32 = arith.constant 0 : index
    %49 = vector.load %arg13[%c0_30, %c0_31, %c0_32] : memref<1x8x128xf32, #tpu.memory_space<vmem>>, vector<1x8x128xf32>
    %50 = vector.shape_cast %49 : vector<1x8x128xf32> to vector<8x128xf32>
    %51 = vector.shape_cast %48 : vector<8x128xf32> to vector<1x8x128xf32>
    tpu.vector_store %arg13[%c0_30, %c0_31, %c0_32], %51 {strides = array<i32>} : memref<1x8x128xf32, #tpu.memory_space<vmem>>, vector<1x8x128xf32>,
    %52 = arith.mulf %37, %43 : vector<8x128xf32>
    %c64_i32_33 = arith.constant 64 : i32
    %53 = tpu.dynamic_rotate %37 by %c64_i32_33 dim 1 : vector<8x128xf32>, i32 -> vector<8x128xf32>
    %54 = arith.mulf %53, %44 : vector<8x128xf32>
    %55 = arith.addf %52, %54 : vector<8x128xf32>
    %c0_34 = arith.constant 0 : index
    %c0_35 = arith.constant 0 : index
    %c0_36 = arith.constant 0 : index
    %56 = vector.load %arg14[%c0_34, %c0_35, %c0_36] : memref<1x8x128xf32, #tpu.memory_space<vmem>>, vector<1x8x128xf32>
    %57 = vector.shape_cast %56 : vector<1x8x128xf32> to vector<8x128xf32>
    %58 = vector.shape_cast %55 : vector<8x128xf32> to vector<1x8x128xf32>
    tpu.vector_store %arg14[%c0_34, %c0_35, %c0_36], %58 {strides = array<i32>} : memref<1x8x128xf32, #tpu.memory_space<vmem>>, vector<1x8x128xf32>,
    %c0_37 = arith.constant 0 : index
    %c0_38 = arith.constant 0 : index
    %c0_39 = arith.constant 0 : index
    %59 = vector.load %arg15[%c0_37, %c0_38, %c0_39] : memref<1x8x128xf32, #tpu.memory_space<vmem>>, vector<1x8x128xf32>
    %60 = vector.shape_cast %59 : vector<1x8x128xf32> to vector<8x128xf32>
    %61 = vector.shape_cast %42 : vector<8x128xf32> to vector<1x8x128xf32>
    tpu.vector_store %arg15[%c0_37, %c0_38, %c0_39], %61 {strides = array<i32>} : memref<1x8x128xf32, #tpu.memory_space<vmem>>, vector<1x8x128xf32>,
    return
  }
  func.func @transform_0(%arg0: i32, %arg1: i32) -> (i32, i32, i32) {
    %c0_i32 = arith.constant 0 : i32
    %c0_i32_0 = arith.constant 0 : i32
    return %arg0, %arg1, %c0_i32 : i32, i32, i32
  }
  func.func @transform_1(%arg0: i32, %arg1: i32) -> (i32, i32) {
    %c0_i32 = arith.constant 0 : i32
    %c0_i32_0 = arith.constant 0 : i32
    %c0_i32_1 = arith.constant 0 : i32
    return %c0_i32, %c0_i32_0 : i32, i32
  }
  func.func @transform_2(%arg0: i32, %arg1: i32) -> (i32, i32) {
    %c0_i32 = arith.constant 0 : i32
    %c0_i32_0 = arith.constant 0 : i32
    %c0_i32_1 = arith.constant 0 : i32
    return %c0_i32, %c0_i32_0 : i32, i32
  }
  func.func @transform_3(%arg0: i32, %arg1: i32) -> (i32, i32) {
    %c0_i32 = arith.constant 0 : i32
    %c0_i32_0 = arith.constant 0 : i32
    %c0_i32_1 = arith.constant 0 : i32
    return %c0_i32, %c0_i32_0 : i32, i32
  }
  func.func @transform_4(%arg0: i32, %arg1: i32) -> (i32, i32) {
    %c0_i32 = arith.constant 0 : i32
    %c0_i32_0 = arith.constant 0 : i32
    %c0_i32_1 = arith.constant 0 : i32
    return %c0_i32, %c0_i32_0 : i32, i32
  }
  func.func @transform_5(%arg0: i32, %arg1: i32) -> (i32, i32) {
    %c0_i32 = arith.constant 0 : i32
    %c0_i32_0 = arith.constant 0 : i32
    %c0_i32_1 = arith.constant 0 : i32
    return %c0_i32, %c0_i32_0 : i32, i32
  }
  func.func @transform_6(%arg0: i32, %arg1: i32) -> (i32, i32) {
    %c0_i32 = arith.constant 0 : i32
    %c0_i32_0 = arith.constant 0 : i32
    %c0_i32_1 = arith.constant 0 : i32
    return %c0_i32, %c0_i32_0 : i32, i32
  }
  func.func @transform_7(%arg0: i32, %arg1: i32) -> (i32, i32) {
    %c0_i32 = arith.constant 0 : i32
    %c0_i32_0 = arith.constant 0 : i32
    %c0_i32_1 = arith.constant 0 : i32
    return %c0_i32, %c0_i32_0 : i32, i32
  }
  func.func @transform_8(%arg0: i32, %arg1: i32) -> (i32, i32) {
    %c0_i32 = arith.constant 0 : i32
    %c0_i32_0 = arith.constant 0 : i32
    %c0_i32_1 = arith.constant 0 : i32
    return %c0_i32, %c0_i32_0 : i32, i32
  }
  func.func @transform_9(%arg0: i32, %arg1: i32) -> (i32, i32) {
    %c0_i32 = arith.constant 0 : i32
    %c0_i32_0 = arith.constant 0 : i32
    return %arg1, %c0_i32 : i32, i32
  }
  func.func @transform_10(%arg0: i32, %arg1: i32) -> (i32, i32) {
    %c0_i32 = arith.constant 0 : i32
    %c0_i32_0 = arith.constant 0 : i32
    return %arg1, %c0_i32 : i32, i32
  }
  func.func @transform_11(%arg0: i32, %arg1: i32) -> (i32, i32, i32) {
    %c0_i32 = arith.constant 0 : i32
    %c0_i32_0 = arith.constant 0 : i32
    return %arg0, %arg1, %c0_i32 : i32, i32, i32
  }
  func.func @transform_12(%arg0: i32, %arg1: i32) -> (i32, i32, i32) {
    %c0_i32 = arith.constant 0 : i32
    %c0_i32_0 = arith.constant 0 : i32
    return %arg0, %arg1, %c0_i32 : i32, i32, i32
  }
  func.func @transform_13(%arg0: i32, %arg1: i32) -> (i32, i32, i32) {
    %c0_i32 = arith.constant 0 : i32
    %c0_i32_0 = arith.constant 0 : i32
    return %arg0, %arg1, %c0_i32 : i32, i32, i32
  }
}

module attributes {stable_mosaic.version = 11 : i64} {
  func.func @_flash_attn_kernel(%arg0: i32, %arg1: i32, %arg2: i32, %arg3: i32, %arg4: memref<1x1x8x32xf32, #tpu.memory_space<vmem>>, %arg5: memref<1x1x8x32xf32, #tpu.memory_space<vmem>>, %arg6: memref<1x1x8x32xf32, #tpu.memory_space<vmem>>, %arg7: memref<1x1x8x32xf32, #tpu.memory_space<vmem>>, %arg8: memref<8x1xf32, #tpu.memory_space<vmem>>, %arg9: memref<8x1xf32, #tpu.memory_space<vmem>>, %arg10: memref<8x32xf32, #tpu.memory_space<vmem>>) attributes {dimension_semantics = [#tpu.dimension_semantics<parallel>, #tpu.dimension_semantics<parallel>, #tpu.dimension_semantics<parallel>, #tpu.dimension_semantics<arbitrary>], iteration_bounds = array<i64: 2, 4, 1, 1>, scalar_prefetch = 0 : i64, scratch_operands = 3 : i64, tpu.core_type = #tpu.core_type<tc>, window_params = [{transform_indices = @transform_0, window_bounds = array<i64: 1, 1, 8, 32>}, {transform_indices = @transform_1, window_bounds = array<i64: 1, 1, 8, 32>}, {transform_indices = @transform_2, window_bounds = array<i64: 1, 1, 8, 32>}, {transform_indices = @transform_3, window_bounds = array<i64: 1, 1, 8, 32>}]} {
    %c0_i32 = arith.constant 0 : i32
    %0 = arith.cmpi eq, %arg3, %c0_i32 : i32
    %1 = arith.extui %0 : i1 to i32
    %c0_i32_0 = arith.constant 0 : i32
    %2 = arith.cmpi ne, %1, %c0_i32_0 : i32
    scf.if %2 {
      %cst_30 = arith.constant 0xFF800000 : f32
      %37 = vector.broadcast %cst_30 : f32 to vector<8x1xf32>
      %c0_31 = arith.constant 0 : index
      %c0_32 = arith.constant 0 : index
      %38 = vector.load %arg8[%c0_31, %c0_32] : memref<8x1xf32, #tpu.memory_space<vmem>>, vector<8x1xf32>
      tpu.vector_store %arg8[%c0_31, %c0_32], %37 {strides = array<i32>} : memref<8x1xf32, #tpu.memory_space<vmem>>, vector<8x1xf32>,
      %cst_33 = arith.constant 0.000000e+00 : f32
      %39 = vector.broadcast %cst_33 : f32 to vector<8x1xf32>
      %c0_34 = arith.constant 0 : index
      %c0_35 = arith.constant 0 : index
      %40 = vector.load %arg9[%c0_34, %c0_35] : memref<8x1xf32, #tpu.memory_space<vmem>>, vector<8x1xf32>
      tpu.vector_store %arg9[%c0_34, %c0_35], %39 {strides = array<i32>} : memref<8x1xf32, #tpu.memory_space<vmem>>, vector<8x1xf32>,
      %cst_36 = arith.constant 0.000000e+00 : f32
      %41 = vector.broadcast %cst_36 : f32 to vector<8x32xf32>
      %c0_37 = arith.constant 0 : index
      %c0_38 = arith.constant 0 : index
      %42 = vector.load %arg10[%c0_37, %c0_38] : memref<8x32xf32, #tpu.memory_space<vmem>>, vector<8x32xf32>
      tpu.vector_store %arg10[%c0_37, %c0_38], %41 {strides = array<i32>} : memref<8x32xf32, #tpu.memory_space<vmem>>, vector<8x32xf32>,
    } else {
    }
    %c0 = arith.constant 0 : index
    %c0_1 = arith.constant 0 : index
    %c0_2 = arith.constant 0 : index
    %c0_3 = arith.constant 0 : index
    %3 = vector.load %arg4[%c0, %c0_1, %c0_2, %c0_3] : memref<1x1x8x32xf32, #tpu.memory_space<vmem>>, vector<1x1x8x32xf32>
    %4 = vector.shape_cast %3 : vector<1x1x8x32xf32> to vector<8x32xf32>
    %c0_4 = arith.constant 0 : index
    %c0_5 = arith.constant 0 : index
    %c0_6 = arith.constant 0 : index
    %c0_7 = arith.constant 0 : index
    %5 = vector.load %arg5[%c0_4, %c0_5, %c0_6, %c0_7] : memref<1x1x8x32xf32, #tpu.memory_space<vmem>>, vector<1x1x8x32xf32>
    %6 = vector.shape_cast %5 : vector<1x1x8x32xf32> to vector<8x32xf32>
    %c0_8 = arith.constant 0 : index
    %c0_9 = arith.constant 0 : index
    %c0_10 = arith.constant 0 : index
    %c0_11 = arith.constant 0 : index
    %7 = vector.load %arg6[%c0_8, %c0_9, %c0_10, %c0_11] : memref<1x1x8x32xf32, #tpu.memory_space<vmem>>, vector<1x1x8x32xf32>
    %8 = vector.shape_cast %7 : vector<1x1x8x32xf32> to vector<8x32xf32>
    %cst = arith.constant dense<0.000000e+00> : vector<8x8xf32>
    %9 = tpu.matmul %4, %6, %cst {dimension_numbers = #tpu.dot_dimension_numbers<[1], [1], [0], [0], [0, 0, 1, 0], [], []>} : vector<8x32xf32>, vector<8x32xf32>, vector<8x8xf32> -> vector<8x8xf32>
    %cst_12 = arith.constant 0.176776692 : f32
    %10 = vector.broadcast %cst_12 : f32 to vector<8x8xf32>
    %11 = arith.mulf %9, %10 : vector<8x8xf32>
    %c0_13 = arith.constant 0 : index
    %c0_14 = arith.constant 0 : index
    %12 = vector.load %arg8[%c0_13, %c0_14] : memref<8x1xf32, #tpu.memory_space<vmem>>, vector<8x1xf32>
    %cst_15 = arith.constant dense<0xFF800000> : vector<8xf32>
    %13 = vector.multi_reduction <maximumf>, %11, %cst_15 [1] : vector<8x8xf32> to vector<8xf32>
    %14 = vector.shape_cast %13 : vector<8xf32> to vector<8x1xf32>
    %15 = arith.maximumf %12, %14 : vector<8x1xf32>
    %16 = arith.subf %12, %15 : vector<8x1xf32>
    %17 = math.exp %16 : vector<8x1xf32>
    %18 = vector.broadcast %15 : vector<8x1xf32> to vector<8x8xf32>
    %19 = arith.subf %11, %18 : vector<8x8xf32>
    %20 = math.exp %19 : vector<8x8xf32>
    %c0_16 = arith.constant 0 : index
    %c0_17 = arith.constant 0 : index
    %21 = vector.load %arg9[%c0_16, %c0_17] : memref<8x1xf32, #tpu.memory_space<vmem>>, vector<8x1xf32>
    %22 = arith.mulf %17, %21 : vector<8x1xf32>
    %cst_18 = arith.constant dense<0.000000e+00> : vector<8xf32>
    %23 = vector.multi_reduction <add>, %20, %cst_18 [1] : vector<8x8xf32> to vector<8xf32>
    %24 = vector.shape_cast %23 : vector<8xf32> to vector<8x1xf32>
    %25 = arith.addf %22, %24 : vector<8x1xf32>
    %c0_19 = arith.constant 0 : index
    %c0_20 = arith.constant 0 : index
    %26 = vector.load %arg9[%c0_19, %c0_20] : memref<8x1xf32, #tpu.memory_space<vmem>>, vector<8x1xf32>
    tpu.vector_store %arg9[%c0_19, %c0_20], %25 {strides = array<i32>} : memref<8x1xf32, #tpu.memory_space<vmem>>, vector<8x1xf32>,
    %c0_21 = arith.constant 0 : index
    %c0_22 = arith.constant 0 : index
    %27 = vector.load %arg10[%c0_21, %c0_22] : memref<8x32xf32, #tpu.memory_space<vmem>>, vector<8x32xf32>
    %28 = vector.broadcast %17 : vector<8x1xf32> to vector<8x32xf32>
    %29 = arith.mulf %28, %27 : vector<8x32xf32>
    %cst_23 = arith.constant dense<0.000000e+00> : vector<8x32xf32>
    %30 = tpu.matmul %20, %8, %cst_23 {dimension_numbers = #tpu.dot_dimension_numbers<[1], [0], [0], [1], [0, 0, 1, 1], [], []>} : vector<8x8xf32>, vector<8x32xf32>, vector<8x32xf32> -> vector<8x32xf32>
    %31 = arith.addf %29, %30 : vector<8x32xf32>
    %c0_24 = arith.constant 0 : index
    %c0_25 = arith.constant 0 : index
    %32 = vector.load %arg10[%c0_24, %c0_25] : memref<8x32xf32, #tpu.memory_space<vmem>>, vector<8x32xf32>
    tpu.vector_store %arg10[%c0_24, %c0_25], %31 {strides = array<i32>} : memref<8x32xf32, #tpu.memory_space<vmem>>, vector<8x32xf32>,
    %c0_26 = arith.constant 0 : index
    %c0_27 = arith.constant 0 : index
    %33 = vector.load %arg8[%c0_26, %c0_27] : memref<8x1xf32, #tpu.memory_space<vmem>>, vector<8x1xf32>
    tpu.vector_store %arg8[%c0_26, %c0_27], %15 {strides = array<i32>} : memref<8x1xf32, #tpu.memory_space<vmem>>, vector<8x1xf32>,
    %c0_i32_28 = arith.constant 0 : i32
    %34 = arith.cmpi eq, %arg3, %c0_i32_28 : i32
    %35 = arith.extui %34 : i1 to i32
    %c0_i32_29 = arith.constant 0 : i32
    %36 = arith.cmpi ne, %35, %c0_i32_29 : i32
    scf.if %36 {
      %c0_30 = arith.constant 0 : index
      %c0_31 = arith.constant 0 : index
      %37 = vector.load %arg10[%c0_30, %c0_31] : memref<8x32xf32, #tpu.memory_space<vmem>>, vector<8x32xf32>
      %c0_32 = arith.constant 0 : index
      %c0_33 = arith.constant 0 : index
      %38 = vector.load %arg9[%c0_32, %c0_33] : memref<8x1xf32, #tpu.memory_space<vmem>>, vector<8x1xf32>
      %39 = tpu.reciprocal %38 {approx = true} : vector<8x1xf32> -> vector<8x1xf32>
      %40 = vector.broadcast %39 : vector<8x1xf32> to vector<8x32xf32>
      %41 = arith.mulf %37, %40 : vector<8x32xf32>
      %c0_34 = arith.constant 0 : index
      %c0_35 = arith.constant 0 : index
      %c0_36 = arith.constant 0 : index
      %c0_37 = arith.constant 0 : index
      %42 = vector.load %arg7[%c0_34, %c0_35, %c0_36, %c0_37] : memref<1x1x8x32xf32, #tpu.memory_space<vmem>>, vector<1x1x8x32xf32>
      %43 = vector.shape_cast %42 : vector<1x1x8x32xf32> to vector<8x32xf32>
      %44 = vector.shape_cast %41 : vector<8x32xf32> to vector<1x1x8x32xf32>
      tpu.vector_store %arg7[%c0_34, %c0_35, %c0_36, %c0_37], %44 {strides = array<i32>} : memref<1x1x8x32xf32, #tpu.memory_space<vmem>>, vector<1x1x8x32xf32>,
    } else {
    }
    return
  }
  func.func @transform_0(%arg0: i32, %arg1: i32, %arg2: i32, %arg3: i32) -> (i32, i32, i32, i32) {
    %c0_i32 = arith.constant 0 : i32
    %c0_i32_0 = arith.constant 0 : i32
    return %arg0, %arg1, %arg2, %c0_i32 : i32, i32, i32, i32
  }
  func.func @transform_1(%arg0: i32, %arg1: i32, %arg2: i32, %arg3: i32) -> (i32, i32, i32, i32) {
    %c0_i32 = arith.constant 0 : i32
    %c0_i32_0 = arith.constant 0 : i32
    return %arg0, %arg1, %arg3, %c0_i32 : i32, i32, i32, i32
  }
  func.func @transform_2(%arg0: i32, %arg1: i32, %arg2: i32, %arg3: i32) -> (i32, i32, i32, i32) {
    %c0_i32 = arith.constant 0 : i32
    %c0_i32_0 = arith.constant 0 : i32
    return %arg0, %arg1, %arg3, %c0_i32 : i32, i32, i32, i32
  }
  func.func @transform_3(%arg0: i32, %arg1: i32, %arg2: i32, %arg3: i32) -> (i32, i32, i32, i32) {
    %c0_i32 = arith.constant 0 : i32
    %c0_i32_0 = arith.constant 0 : i32
    return %arg0, %arg1, %arg2, %c0_i32 : i32, i32, i32, i32
  }
}

module attributes {stable_mosaic.version = 11 : i64} {
  func.func @_out_proj_kernel(%arg0: i32, %arg1: i32, %arg2: memref<1x8x128xf32, #tpu.memory_space<vmem>>, %arg3: memref<128x128xf32, #tpu.memory_space<vmem>>, %arg4: memref<1x128xf32, #tpu.memory_space<vmem>>, %arg5: memref<1x8x128xf32, #tpu.memory_space<vmem>>) attributes {dimension_semantics = [#tpu.dimension_semantics<parallel>, #tpu.dimension_semantics<parallel>], iteration_bounds = array<i64: 2, 1>, scalar_prefetch = 0 : i64, scratch_operands = 0 : i64, tpu.core_type = #tpu.core_type<tc>, window_params = [{transform_indices = @transform_0, window_bounds = array<i64: 1, 8, 128>}, {pipeline_mode = #tpu.pipeline_mode<synchronous>, transform_indices = @transform_1, window_bounds = array<i64: 128, 128>}, {pipeline_mode = #tpu.pipeline_mode<synchronous>, transform_indices = @transform_2, window_bounds = array<i64: 1, 128>}, {transform_indices = @transform_3, window_bounds = array<i64: 1, 8, 128>}]} {
    %c0 = arith.constant 0 : index
    %c0_0 = arith.constant 0 : index
    %c0_1 = arith.constant 0 : index
    %0 = vector.load %arg2[%c0, %c0_0, %c0_1] : memref<1x8x128xf32, #tpu.memory_space<vmem>>, vector<1x8x128xf32>
    %1 = vector.shape_cast %0 : vector<1x8x128xf32> to vector<8x128xf32>
    %c0_2 = arith.constant 0 : index
    %c0_3 = arith.constant 0 : index
    %2 = vector.load %arg3[%c0_2, %c0_3] : memref<128x128xf32, #tpu.memory_space<vmem>>, vector<128x128xf32>
    %cst = arith.constant dense<0.000000e+00> : vector<8x128xf32>
    %3 = tpu.matmul %1, %2, %cst {dimension_numbers = #tpu.dot_dimension_numbers<[1], [0], [0], [1], [0, 0, 1, 1], [], []>} : vector<8x128xf32>, vector<128x128xf32>, vector<8x128xf32> -> vector<8x128xf32>
    %c0_4 = arith.constant 0 : index
    %c0_5 = arith.constant 0 : index
    %4 = vector.load %arg4[%c0_4, %c0_5] : memref<1x128xf32, #tpu.memory_space<vmem>>, vector<1x128xf32>
    %5 = vector.broadcast %4 : vector<1x128xf32> to vector<8x128xf32>
    %6 = arith.addf %3, %5 : vector<8x128xf32>
    %c0_6 = arith.constant 0 : index
    %c0_7 = arith.constant 0 : index
    %c0_8 = arith.constant 0 : index
    %7 = vector.load %arg5[%c0_6, %c0_7, %c0_8] : memref<1x8x128xf32, #tpu.memory_space<vmem>>, vector<1x8x128xf32>
    %8 = vector.shape_cast %7 : vector<1x8x128xf32> to vector<8x128xf32>
    %9 = vector.shape_cast %6 : vector<8x128xf32> to vector<1x8x128xf32>
    tpu.vector_store %arg5[%c0_6, %c0_7, %c0_8], %9 {strides = array<i32>} : memref<1x8x128xf32, #tpu.memory_space<vmem>>, vector<1x8x128xf32>,
    return
  }
  func.func @transform_0(%arg0: i32, %arg1: i32) -> (i32, i32, i32) {
    %c0_i32 = arith.constant 0 : i32
    %c0_i32_0 = arith.constant 0 : i32
    return %arg0, %arg1, %c0_i32 : i32, i32, i32
  }
  func.func @transform_1(%arg0: i32, %arg1: i32) -> (i32, i32) {
    %c0_i32 = arith.constant 0 : i32
    %c0_i32_0 = arith.constant 0 : i32
    %c0_i32_1 = arith.constant 0 : i32
    return %c0_i32, %c0_i32_0 : i32, i32
  }
  func.func @transform_2(%arg0: i32, %arg1: i32) -> (i32, i32) {
    %c0_i32 = arith.constant 0 : i32
    %c0_i32_0 = arith.constant 0 : i32
    %c0_i32_1 = arith.constant 0 : i32
    return %c0_i32, %c0_i32_0 : i32, i32
  }
  func.func @transform_3(%arg0: i32, %arg1: i32) -> (i32, i32, i32) {
    %c0_i32 = arith.constant 0 : i32
    %c0_i32_0 = arith.constant 0 : i32
    return %arg0, %arg1, %c0_i32 : i32, i32, i32
  }
}

</mosaic_0001>

<llo_original>
// kernel: tile.19
$region0: #{tile.19}
  %s0 = inlined_call_operand.vmem [shape: f32[8,4,16], index: 0, kind: input, shape index: {}]
  %s1 = inlined_call_operand.vmem [shape: f32[8,64], index: 1, kind: output, shape index: {}]
  $region1: #{tile.19} parent=0
    #allocation0 [shape = 'u8[32768]{0}', space=vmem, size = 0x8000, scoped, tag = 'scoped mem for input reshape']
    %s3 = ssub.s32 16, 1
    %s4 = scalar_lea.vmem %s0, 28
    %v5 = vld [vmem:[%s4] sm:%s3]
    %s6 = scalar_lea.vmem [#allocation0], 56
    %7 = vst [vmem:[%s6] sm:%s3] %v5
    %s8 = scalar_lea.vmem %s0, 24
    %v9 = vld [vmem:[%s8] sm:%s3]
    %s10 = scalar_lea.vmem [#allocation0], 48
    %11 = vst [vmem:[%s10] sm:%s3] %v9
    %s12 = scalar_lea.vmem %s0, 20
    %v13 = vld [vmem:[%s12] sm:%s3]
    %s14 = scalar_lea.vmem [#allocation0], 40
    %15 = vst [vmem:[%s14] sm:%s3] %v13
    %s16 = scalar_lea.vmem %s0, 16
    %v17 = vld [vmem:[%s16] sm:%s3]
    %s18 = scalar_lea.vmem [#allocation0], 32
    %19 = vst [vmem:[%s18] sm:%s3] %v17
    %s20 = scalar_lea.vmem %s0, 12
    %v21 = vld [vmem:[%s20] sm:%s3]
    %s22 = scalar_lea.vmem [#allocation0], 24
    %23 = vst [vmem:[%s22] sm:%s3] %v21
    %s24 = scalar_lea.vmem %s0, 8
    %v25 = vld [vmem:[%s24] sm:%s3]
    %s26 = scalar_lea.vmem [#allocation0], 16
    %27 = vst [vmem:[%s26] sm:%s3] %v25
    %s28 = scalar_lea.vmem %s0, 4
    %v29 = vld [vmem:[%s28] sm:%s3]
    %s30 = scalar_lea.vmem [#allocation0], 8
    %31 = vst [vmem:[%s30] sm:%s3] %v29
    %v32 = vld [vmem:[%s0] sm:%s3]
    %33 = vst [vmem:[#allocation0] sm:%s3] %v32
    %v34 = vld [vmem:[#allocation0] ss:$8 sm:$0xf]
    %v35 = vld [vmem:[#allocation0] ss:$8 sm:$0xf0]
    %vm36 = vcmask 1047556
    %v37 = vsel %vm36, %v35, %v34
    %vm38 = vcmask 130048
    %39 = vst.msk [vmem:[%s1] sm:$0xff] %vm38, %v37
    %s40 = scalar_lea.vmem [#allocation0], 3
    %v41 = vld [vmem:[%s40] ss:$8 sm:$0xf]
    %s42 = scalar_lea.vmem [#allocation0], 3
    %v43 = vld [vmem:[%s42] ss:$8 sm:$0xf0]
    %vm44 = vcmask 1047556
    %v45 = vsel %vm44, %v43, %v41
    %46 = vrot.lane.b32.xlu0 %v45, 48
    %v47 = vpop.permute.xlu0 %46
    %vm48 = vcmask 523648
    %49 = vst.msk [vmem:[%s1] sm:$0xff] %vm48, %v47
    %s50 = scalar_lea.vmem [#allocation0], 2
    %v51 = vld [vmem:[%s50] ss:$8 sm:$0xf]
    %s52 = scalar_lea.vmem [#allocation0], 2
    %v53 = vld [vmem:[%s52] ss:$8 sm:$0xf0]
    %vm54 = vcmask 1047556
    %v55 = vsel %vm54, %v53, %v51
    %56 = vrot.lane.b32.xlu0 %v55, 32
    %v57 = vpop.permute.xlu0 %56
    %vm58 = vcmask 392448
    %59 = vst.msk [vmem:[%s1] sm:$0xff] %vm58, %v57
    %s60 = scalar_lea.vmem [#allocation0], 1
    %v61 = vld [vmem:[%s60] ss:$8 sm:$0xf]
    %s62 = scalar_lea.vmem [#allocation0], 1
    %v63 = vld [vmem:[%s62] ss:$8 sm:$0xf0]
    %vm64 = vcmask 1047556
    %v65 = vsel %vm64, %v63, %v61
    %66 = vrot.lane.b32.xlu0 %v65, 16
    %v67 = vpop.permute.xlu0 %66
    %vm68 = vcmask 261248
    %69 = vst.msk [vmem:[%s1] sm:$0xff] %vm68, %v67

// kernel: neg.1
$region0: #{neg.1}
  #allocation0 [shape = 's32[1]{0}', space=sflag, size = 0x4, scoped, tag = 'scoped memory for neg.1']
  %s0 = inlined_call_operand.vmem [shape: f32[8,64], index: 0, kind: input, shape index: {}]
  %s1 = inlined_call_operand.vmem [shape: f32[8,64], index: 1, kind: output, shape index: {}]
  %v2 = vld [vmem:[%s0] sm:$0xff]
  %3 = xla_tuple %v2
  %4 = xla_tuple %3
  %v5 = vxor.u32 %v2, 2147483648
  %6 = xla_tuple %v5
  %7 = vst [vmem:[%s1] sm:$0xff] %v5

// kernel: tile.14
$region0: #{tile.14}
  %s0 = inlined_call_operand.vmem [shape: f32[8,8,16], index: 0, kind: input, shape index: {}]
  %s1 = inlined_call_operand.vmem [shape: f32[8,128], index: 1, kind: output, shape index: {}]
  %v2 = vld [vmem:[%s0] ss:$8 sm:$0xf]
  %v3 = vld [vmem:[%s0] ss:$8 sm:$0xf0]
  %vm4 = vcmask 1047556
  %v5 = vsel %vm4, %v3, %v2
  %vm6 = vcmask 130048
  %7 = vst.msk [vmem:[%s1] sm:$0xff] %vm6, %v5
  %s8 = scalar_lea.vmem %s0, 7
  %v9 = vld [vmem:[%s8] ss:$8 sm:$0xf]
  %s10 = scalar_lea.vmem %s0, 7
  %v11 = vld [vmem:[%s10] ss:$8 sm:$0xf0]
  %vm12 = vcmask 1047556
  %v13 = vsel %vm12, %v11, %v9
  %14 = vrot.lane.b32.xlu0 %v13, 112
  %v15 = vpop.permute.xlu0 %14
  %vm16 = vcmask 1048448
  %17 = vst.msk [vmem:[%s1] sm:$0xff] %vm16, %v15
  %s18 = scalar_lea.vmem %s0, 6
  %v19 = vld [vmem:[%s18] ss:$8 sm:$0xf]
  %s20 = scalar_lea.vmem %s0, 6
  %v21 = vld [vmem:[%s20] ss:$8 sm:$0xf0]
  %vm22 = vcmask 1047556
  %v23 = vsel %vm22, %v21, %v19
  %24 = vrot.lane.b32.xlu0 %v23, 96
  %v25 = vpop.permute.xlu0 %24
  %vm26 = vcmask 917248
  %27 = vst.msk [vmem:[%s1] sm:$0xff] %vm26, %v25
  %s28 = scalar_lea.vmem %s0, 5
  %v29 = vld [vmem:[%s28] ss:$8 sm:$0xf]
  %s30 = scalar_lea.vmem %s0, 5
  %v31 = vld [vmem:[%s30] ss:$8 sm:$0xf0]
  %vm32 = vcmask 1047556
  %v33 = vsel %vm32, %v31, %v29
  %34 = vrot.lane.b32.xlu0 %v33, 80
  %v35 = vpop.permute.xlu0 %34
  %vm36 = vcmask 786048
  %37 = vst.msk [vmem:[%s1] sm:$0xff] %vm36, %v35
  %s38 = scalar_lea.vmem %s0, 4
  %v39 = vld [vmem:[%s38] ss:$8 sm:$0xf]
  %s40 = scalar_lea.vmem %s0, 4
  %v41 = vld [vmem:[%s40] ss:$8 sm:$0xf0]
  %vm42 = vcmask 1047556
  %v43 = vsel %vm42, %v41, %v39
  %44 = vrot.lane.b32.xlu0 %v43, 64
  %v45 = vpop.permute.xlu0 %44
  %vm46 = vcmask 654848
  %47 = vst.msk [vmem:[%s1] sm:$0xff] %vm46, %v45
  %s48 = scalar_lea.vmem %s0, 3
  %v49 = vld [vmem:[%s48] ss:$8 sm:$0xf]
  %s50 = scalar_lea.vmem %s0, 3
  %v51 = vld [vmem:[%s50] ss:$8 sm:$0xf0]
  %vm52 = vcmask 1047556
  %v53 = vsel %vm52, %v51, %v49
  %54 = vrot.lane.b32.xlu0 %v53, 48
  %v55 = vpop.permute.xlu0 %54
  %vm56 = vcmask 523648
  %57 = vst.msk [vmem:[%s1] sm:$0xff] %vm56, %v55
  %s58 = scalar_lea.vmem %s0, 2
  %v59 = vld [vmem:[%s58] ss:$8 sm:$0xf]
  %s60 = scalar_lea.vmem %s0, 2
  %v61 = vld [vmem:[%s60] ss:$8 sm:$0xf0]
  %vm62 = vcmask 1047556
  %v63 = vsel %vm62, %v61, %v59
  %64 = vrot.lane.b32.xlu0 %v63, 32
  %v65 = vpop.permute.xlu0 %64
  %vm66 = vcmask 392448
  %67 = vst.msk [vmem:[%s1] sm:$0xff] %vm66, %v65
  %s68 = scalar_lea.vmem %s0, 1
  %v69 = vld [vmem:[%s68] ss:$8 sm:$0xf]
  %s70 = scalar_lea.vmem %s0, 1
  %v71 = vld [vmem:[%s70] ss:$8 sm:$0xf0]
  %vm72 = vcmask 1047556
  %v73 = vsel %vm72, %v71, %v69
  %74 = vrot.lane.b32.xlu0 %v73, 16
  %v75 = vpop.permute.xlu0 %74
  %vm76 = vcmask 261248
  %77 = vst.msk [vmem:[%s1] sm:$0xff] %vm76, %v75

// kernel: self_attention_pallas.4
$region0: #{self_attention_pallas.4}
  #allocation0 [shape = 'u32[]', space=smem, size = 0x4, offset = 0x4, fixed_abs, tag = 'smem constant byte address 0x4 - core index']
  #allocation1 [shape = 'u32[72,128]{1,0:T(1,128)}', space=vmem, size = 0x9000, scoped, tag = 'internal scratch']
  #allocation2 [shape = 'f32[8,1]{1,0:T(8,128)}', space=vmem, size = 0x1000, scoped, tag = 'scratch operand']
  #allocation3 [shape = 'f32[8,1]{1,0:T(8,128)}', space=vmem, size = 0x1000, scoped, tag = 'scratch operand']
  #allocation4 [shape = 'f32[8,32]{1,0:T(8,128)}', space=vmem, size = 0x1000, scoped, tag = 'scratch operand']
  %s0 = inlined_call_operand.vmem [shape: f32[2,4,8,32], index: 0, kind: input, shape index: {}]
  %s1 = inlined_call_operand.vmem [shape: f32[2,4,8,32], index: 1, kind: input, shape index: {}]
  %s2 = inlined_call_operand.vmem [shape: f32[2,4,8,32], index: 2, kind: input, shape index: {}]
  %s3 = inlined_call_operand.vmem [shape: f32[2,4,8,32], index: 3, kind: output, shape index: {}]
  %s4 = sld [smem:[#allocation0]]
  $region53: #{self_attention_pallas.4} parent=0
    _
  %s6 = ssub.s32 1, %s4
  %s7 = scalar_select 0, %s6, %s4
  loop: start=0, step=1, limit=10
  $region2: #{self_attention_pallas.4} parent=0 // loop_pre_header
    _
  $region3: #{self_attention_pallas.4} parent=0 // loop_header
    %s9 = sphi 0, %s13
    %p10 = scmp.ge.s32.totalorder %s9, 10
    %s16 = sphi 0, %s42
    %s17 = sphi 0, %s38
    %s18 = sphi 0, %s34
    %s19 = sphi 0, %s30
    %s20 = sphi 0, %s16
    %s21 = sphi 0, %s17
    %s22 = sphi 0, %s18
    %s23 = sphi 0, %s19
    %s24 = sphi 0, %s20
    %s25 = sphi 0, %s21
    %s26 = sphi 0, %s22
    %s27 = sphi 0, %s23
    %s49 = sphi 0, %s51
    %s52 = sphi 0, %s49
    %s53 = sphi 0, %s52
    %s69 = sphi 0, %s53
    %s79 = sphi 0, %s81
    %s82 = sphi 0, %s79
    %s83 = sphi 0, %s82
    %s99 = sphi 0, %s83
    %s109 = sphi 0, %s111
    %s112 = sphi 0, %s109
    %s113 = sphi 0, %s112
    %s129 = sphi 0, %s113
    %s139 = sphi 0, %s141
    %s142 = sphi 0, %s139
    %s143 = sphi 0, %s142
    %s159 = sphi 0, %s143
  $region4: #{self_attention_pallas.4} parent=0 // loop_header_branch
    %12 = sbr.rel (%p10) target = $region8
  $region5: #{self_attention_pallas.4} parent=0 // loop_body
    %s14 = ssub.s32 %s9, 1
    %s15 = ssub.s32 %s9, 2
    %s28 = sadd.s32 1, %s19
    %p29 = scmp.ge.s32.totalorder %s28, 1
    %s30 = scalar_select %p29, 0, %s28
    %s31 = sadd.s32 1, %s18
    %s32 = scalar_select %p29, %s31, %s18
    %p33 = scmp.ge.s32.totalorder %s32, 1
    %s34 = scalar_select %p33, 0, %s32
    %s35 = sadd.s32 1, %s17
    %s36 = scalar_select %p33, %s35, %s17
    %p37 = scmp.ge.s32.totalorder %s36, 4
    %s38 = scalar_select %p37, 0, %s36
    %s39 = sadd.s32 1, %s16
    %s40 = scalar_select %p37, %s39, %s16
    %p41 = scmp.ge.s32.totalorder %s40, 2
    %s42 = scalar_select %p41, 0, %s40
    %s43 = ssub.s32 %s16, %s42
    %s44 = ssub.s32 %s17, %s38
    %s45 = sor.u32 %s43, %s44
    %s46 = ssub.s32 %s18, %s34
    %s47 = sor.u32 %s45, %s46
    %p48 = scmp.eq.s32.totalorder %s47, 0
    %s50 = sadd.s32 %s49, 1
    %s51 = scalar_select %p48, %s49, %s50
    %p54 = pneg %p48
    %p55 = scmp.eq.s32.totalorder %s9, 7
    %p56 = por %p54, %p55
    %p57 = scmp.ne.s32.totalorder %s49, %s52
    %p58 = scmp.eq.s32.totalorder %s9, 0
    %p59 = por %p57, %p58
    %p60 = scmp.ne.s32.totalorder %s49, %s52
    %p61 = scmp.eq.s32.totalorder %s14, 7
    %p62 = por %p60, %p61
    %p63 = scmp.ne.s32.totalorder %s52, %s53
    %p64 = scmp.eq.s32.totalorder %s14, 0
    %p65 = por %p63, %p64
    %p66 = scmp.ne.s32.totalorder %s52, %s53
    %p67 = scmp.eq.s32.totalorder %s15, 7
    %p68 = por %p66, %p67
    %p70 = scmp.ne.s32.totalorder %s53, %s69
    %p71 = scmp.eq.s32.totalorder %s15, 0
    %p72 = por %p70, %p71
    %s73 = ssub.s32 %s16, %s42
    %s74 = ssub.s32 %s17, %s38
    %s75 = sor.u32 %s73, %s74
    %s76 = ssub.s32 %s19, %s30
    %s77 = sor.u32 %s75, %s76
    %p78 = scmp.eq.s32.totalorder %s77, 0
    %s80 = sadd.s32 %s79, 1
    %s81 = scalar_select %p78, %s79, %s80
    %p84 = pneg %p78
    %p85 = scmp.eq.s32.totalorder %s9, 7
    %p86 = por %p84, %p85
    %p87 = scmp.ne.s32.totalorder %s79, %s82
    %p88 = scmp.eq.s32.totalorder %s9, 0
    %p89 = por %p87, %p88
    %p90 = scmp.ne.s32.totalorder %s79, %s82
    %p91 = scmp.eq.s32.totalorder %s14, 7
    %p92 = por %p90, %p91
    %p93 = scmp.ne.s32.totalorder %s82, %s83
    %p94 = scmp.eq.s32.totalorder %s14, 0
    %p95 = por %p93, %p94
    %p96 = scmp.ne.s32.totalorder %s82, %s83
    %p97 = scmp.eq.s32.totalorder %s15, 7
    %p98 = por %p96, %p97
    %p100 = scmp.ne.s32.totalorder %s83, %s99
    %p101 = scmp.eq.s32.totalorder %s15, 0
    %p102 = por %p100, %p101
    %s103 = ssub.s32 %s16, %s42
    %s104 = ssub.s32 %s17, %s38
    %s105 = sor.u32 %s103, %s104
    %s106 = ssub.s32 %s19, %s30
    %s107 = sor.u32 %s105, %s106
    %p108 = scmp.eq.s32.totalorder %s107, 0
    %s110 = sadd.s32 %s109, 1
    %s111 = scalar_select %p108, %s109, %s110
    %p114 = pneg %p108
    %p115 = scmp.eq.s32.totalorder %s9, 7
    %p116 = por %p114, %p115
    %p117 = scmp.ne.s32.totalorder %s109, %s112
    %p118 = scmp.eq.s32.totalorder %s9, 0
    %p119 = por %p117, %p118
    %p120 = scmp.ne.s32.totalorder %s109, %s112
    %p121 = scmp.eq.s32.totalorder %s14, 7
    %p122 = por %p120, %p121
    %p123 = scmp.ne.s32.totalorder %s112, %s113
    %p124 = scmp.eq.s32.totalorder %s14, 0
    %p125 = por %p123, %p124
    %p126 = scmp.ne.s32.totalorder %s112, %s113
    %p127 = scmp.eq.s32.totalorder %s15, 7
    %p128 = por %p126, %p127
    %p130 = scmp.ne.s32.totalorder %s113, %s129
    %p131 = scmp.eq.s32.totalorder %s15, 0
    %p132 = por %p130, %p131
    %s133 = ssub.s32 %s16, %s42
    %s134 = ssub.s32 %s17, %s38
    %s135 = sor.u32 %s133, %s134
    %s136 = ssub.s32 %s18, %s34
    %s137 = sor.u32 %s135, %s136
    %p138 = scmp.eq.s32.totalorder %s137, 0
    %s140 = sadd.s32 %s139, 1
    %s141 = scalar_select %p138, %s139, %s140
    %p144 = pneg %p138
    %p145 = scmp.eq.s32.totalorder %s9, 7
    %p146 = por %p144, %p145
    %p147 = scmp.ne.s32.totalorder %s139, %s142
    %p148 = scmp.eq.s32.totalorder %s9, 0
    %p149 = por %p147, %p148
    %p150 = scmp.ne.s32.totalorder %s139, %s142
    %p151 = scmp.eq.s32.totalorder %s14, 7
    %p152 = por %p150, %p151
    %p153 = scmp.ne.s32.totalorder %s142, %s143
    %p154 = scmp.eq.s32.totalorder %s14, 0
    %p155 = por %p153, %p154
    %p156 = scmp.ne.s32.totalorder %s142, %s143
    %p157 = scmp.eq.s32.totalorder %s15, 7
    %p158 = por %p156, %p157
    %p160 = scmp.ne.s32.totalorder %s143, %s159
    %p161 = scmp.eq.s32.totalorder %s15, 0
    %p162 = por %p160, %p161
    %p163 = scmp.le.s32.totalorder 1, %s9
    %p164 = scmp.lt.s32.totalorder %s9, 9
    %p165 = pnand %p163, %p164
    %p166 = pneg %p165
    // Predicated region
    $region9: #{self_attention_pallas.4} parent=5 // pred_check
      _
    $region10: #{self_attention_pallas.4} parent=5 // pred_check_branch
      %168 = sbr.rel (%p165) target = $region12
    $region11: #{self_attention_pallas.4} parent=5 // pred_region
      %s169 = ssub.s32 %s9, 1
    $region12: #{self_attention_pallas.4} parent=5 // pred_fallthru
      _
    %p170 = scmp.lt.s32.totalorder %s9, 8
    // Predicated region
    $region13: #{self_attention_pallas.4} parent=5 // pred_check
      %p171 = pneg %p170
    $region14: #{self_attention_pallas.4} parent=5 // pred_check_branch
      %173 = sbr.rel (%p171) target = $region16
    $region15: #{self_attention_pallas.4} parent=5 // pred_region
      // Predicated region
      $region17: #{self_attention_pallas.4} parent=15 // pred_check
        %p174 = pneg %p59
      $region18: #{self_attention_pallas.4} parent=15 // pred_check_branch
        %176 = sbr.rel (%p174) target = $region20
      $region19: #{self_attention_pallas.4} parent=15 // pred_region
        %p177 = scmp.lt.s32.totalorder %s16, 1
        %s178 = scalar_select %p177, %s16, 1
        %p179 = scmp.lt.s32.totalorder %s17, 3
        %s180 = scalar_select %p179, %s17, 3
        %p181 = scmp.lt.s32.totalorder %s18, 0
        %s182 = scalar_select %p181, %s18, 0
        %s183 = sadd.s32 %s182, %s180
        %s184 = smul.addr %s178, 4
        %s185 = sadd.s32 %s183, %s184
        %s186 = smul.addr %s185, 8
        %s187 = scalar_lea.vmem %s0, %s186
      $region20: #{self_attention_pallas.4} parent=15 // pred_fallthru
        _
      // Predicated region
      $region21: #{self_attention_pallas.4} parent=15 // pred_check
        %p188 = pneg %p89
      $region22: #{self_attention_pallas.4} parent=15 // pred_check_branch
        %190 = sbr.rel (%p188) target = $region24
      $region23: #{self_attention_pallas.4} parent=15 // pred_region
        %p191 = scmp.lt.s32.totalorder %s16, 1
        %s192 = scalar_select %p191, %s16, 1
        %p193 = scmp.lt.s32.totalorder %s17, 3
        %s194 = scalar_select %p193, %s17, 3
        %p195 = scmp.lt.s32.totalorder %s19, 0
        %s196 = scalar_select %p195, %s19, 0
        %s197 = sadd.s32 %s196, %s194
        %s198 = smul.addr %s192, 4
        %s199 = sadd.s32 %s197, %s198
        %s200 = smul.addr %s199, 8
        %s201 = scalar_lea.vmem %s1, %s200
      $region24: #{self_attention_pallas.4} parent=15 // pred_fallthru
        _
      // Predicated region
      $region25: #{self_attention_pallas.4} parent=15 // pred_check
        %p202 = pneg %p119
      $region26: #{self_attention_pallas.4} parent=15 // pred_check_branch
        %204 = sbr.rel (%p202) target = $region28
      $region27: #{self_attention_pallas.4} parent=15 // pred_region
        %p205 = scmp.lt.s32.totalorder %s16, 1
        %s206 = scalar_select %p205, %s16, 1
        %p207 = scmp.lt.s32.totalorder %s17, 3
        %s208 = scalar_select %p207, %s17, 3
        %p209 = scmp.lt.s32.totalorder %s19, 0
        %s210 = scalar_select %p209, %s19, 0
        %s211 = sadd.s32 %s210, %s208
        %s212 = smul.addr %s206, 4
        %s213 = sadd.s32 %s211, %s212
        %s214 = smul.addr %s213, 8
        %s215 = scalar_lea.vmem %s2, %s214
      $region28: #{self_attention_pallas.4} parent=15 // pred_fallthru
        _
    $region16: #{self_attention_pallas.4} parent=5 // pred_fallthru
      _
    %p216 = scmp.le.s32.totalorder 1, %s9
    %p217 = scmp.lt.s32.totalorder %s9, 9
    %p218 = pnand %p216, %p217
    %p219 = pneg %p218
    // Predicated region
    $region29: #{self_attention_pallas.4} parent=5 // pred_check
      _
    $region30: #{self_attention_pallas.4} parent=5 // pred_check_branch
      %221 = sbr.rel (%p218) target = $region32
    $region31: #{self_attention_pallas.4} parent=5 // pred_region
      %s222 = ssub.s32 %s9, 1
      %p223 = scmp.lt.s32.totalorder %s20, 1
      %s224 = scalar_select %p223, %s20, 1
      %p225 = scmp.lt.s32.totalorder %s21, 3
      %s226 = scalar_select %p225, %s21, 3
      %p227 = scmp.lt.s32.totalorder %s22, 0
      %s228 = scalar_select %p227, %s22, 0
      %s229 = sadd.s32 %s228, %s226
      %s230 = smul.addr %s224, 4
      %s231 = sadd.s32 %s229, %s230
      %s232 = smul.addr %s231, 8
      %s233 = scalar_lea.vmem %s0, %s232
      %p234 = pneg %p65
      %p235 = pneg %p62
      %p236 = scmp.lt.s32.totalorder %s20, 1
      %s237 = scalar_select %p236, %s20, 1
      %p238 = scmp.lt.s32.totalorder %s21, 3
      %s239 = scalar_select %p238, %s21, 3
      %p240 = scmp.lt.s32.totalorder %s23, 0
      %s241 = scalar_select %p240, %s23, 0
      %s242 = sadd.s32 %s241, %s239
      %s243 = smul.addr %s237, 4
      %s244 = sadd.s32 %s242, %s243
      %s245 = smul.addr %s244, 8
      %s246 = scalar_lea.vmem %s1, %s245
      %p247 = pneg %p95
      %p248 = pneg %p92
      %p249 = scmp.lt.s32.totalorder %s20, 1
      %s250 = scalar_select %p249, %s20, 1
      %p251 = scmp.lt.s32.totalorder %s21, 3
      %s252 = scalar_select %p251, %s21, 3
      %p253 = scmp.lt.s32.totalorder %s23, 0
      %s254 = scalar_select %p253, %s23, 0
      %s255 = sadd.s32 %s254, %s252
      %s256 = smul.addr %s250, 4
      %s257 = sadd.s32 %s255, %s256
      %s258 = smul.addr %s257, 8
      %s259 = scalar_lea.vmem %s2, %s258
      %p260 = pneg %p125
      %p261 = pneg %p122
      %p262 = pneg %p155
      %p263 = pneg %p152
      %p264 = scmp.lt.s32.totalorder %s20, 1
      %s265 = scalar_select %p264, %s20, 1
      %p266 = scmp.lt.s32.totalorder %s21, 3
      %s267 = scalar_select %p266, %s21, 3
      %p268 = scmp.lt.s32.totalorder %s22, 0
      %s269 = scalar_select %p268, %s22, 0
      %s270 = sadd.s32 %s269, %s267
      %s271 = smul.addr %s265, 4
      %s272 = sadd.s32 %s270, %s271
      %s273 = smul.addr %s272, 8
      %s274 = scalar_lea.vmem %s3, %s273
      %p275 = scmp.lt.s32.totalorder %s20, 1
      %s276 = scalar_select %p275, %s20, 1
      %p277 = scmp.lt.s32.totalorder %s21, 3
      %s278 = scalar_select %p277, %s21, 3
      %p279 = scmp.lt.s32.totalorder %s22, 0
      %s280 = scalar_select %p279, %s22, 0
      %s281 = sadd.s32 %s280, %s278
      %s282 = smul.addr %s276, 4
      %s283 = sadd.s32 %s281, %s282
      %s284 = smul.addr %s283, 8
      %s285 = scalar_lea.vmem %s0, %s284
      %p286 = scmp.lt.s32.totalorder %s20, 1
      %s287 = scalar_select %p286, %s20, 1
      %p288 = scmp.lt.s32.totalorder %s21, 3
      %s289 = scalar_select %p288, %s21, 3
      %p290 = scmp.lt.s32.totalorder %s23, 0
      %s291 = scalar_select %p290, %s23, 0
      %s292 = sadd.s32 %s291, %s289
      %s293 = smul.addr %s287, 4
      %s294 = sadd.s32 %s292, %s293
      %s295 = smul.addr %s294, 8
      %s296 = scalar_lea.vmem %s1, %s295
      %p297 = scmp.lt.s32.totalorder %s20, 1
      %s298 = scalar_select %p297, %s20, 1
      %p299 = scmp.lt.s32.totalorder %s21, 3
      %s300 = scalar_select %p299, %s21, 3
      %p301 = scmp.lt.s32.totalorder %s23, 0
      %s302 = scalar_select %p301, %s23, 0
      %s303 = sadd.s32 %s302, %s300
      %s304 = smul.addr %s298, 4
      %s305 = sadd.s32 %s303, %s304
      %s306 = smul.addr %s305, 8
      %s307 = scalar_lea.vmem %s2, %s306
      %p308 = scmp.lt.s32.totalorder %s20, 1
      %s309 = scalar_select %p308, %s20, 1
      %p310 = scmp.lt.s32.totalorder %s21, 3
      %s311 = scalar_select %p310, %s21, 3
      %p312 = scmp.lt.s32.totalorder %s22, 0
      %s313 = scalar_select %p312, %s22, 0
      %s314 = sadd.s32 %s313, %s311
      %s315 = smul.addr %s309, 4
      %s316 = sadd.s32 %s314, %s315
      %s317 = smul.addr %s316, 8
      %s318 = scalar_lea.vmem %s3, %s317
      %p319 = scmp.eq.s32.totalorder %s23, 0
      // Predicated region
      $region33: #{self_attention_pallas.4} parent=31 // pred_check
        %p320 = pneg %p319
      $region34: #{self_attention_pallas.4} parent=31 // pred_check_branch
        %322 = sbr.rel (%p320) target = $region36
      $region35: #{self_attention_pallas.4} parent=31 // pred_region
        %vm323 = vcmask 7168
        %324 = vst.msk [vmem:[#allocation2] sm:$0xff] %vm323, -inf
        %325 = vst.msk [vmem:[#allocation3] sm:$0xff] %vm323, 0.0
        %vm326 = vcmask 261120
        %327 = vst.msk [vmem:[#allocation4] sm:$0xff] %vm326, 0.0
      $region36: #{self_attention_pallas.4} parent=31 // pred_fallthru
        _
      %v328 = vld [vmem:[%s285] sm:$0xff]
      %v329 = vld [vmem:[%s296] sm:$0xff]
      %v330 = vld [vmem:[%s307] sm:$0xff]
      %vm331 = vcmask 261120
      %v333 = vsel %vm331, %v328, 0
      %v336 = vsel %vm331, %v329, 0
      %338 = vmatpush.xpose.msra.mxu0 0.0
      %339 = vmatpush.xpose.msra.mxu0 0.0
      %340 = vmatpush.xpose.msra.mxu0 0.0
      %341 = vmatpush.xpose.msra.mxu0 0.0
      %342 = vmatpush.xpose.msra.mxu0 0.0
      %343 = vmatpush.xpose.msra.mxu0 0.0
      %344 = vmatpush.xpose.msra.mxu0 0.0
      %345 = vmatpush.xpose.msra.mxu0 0.0
      %346 = vmatpush.xpose.msra.mxu0 0.0
      %347 = vmatpush.xpose.msra.mxu0 0.0
      %348 = vmatpush.xpose.msra.mxu0 0.0
      %349 = vmatpush.xpose.msra.mxu0 0.0
      %350 = vmatpush.xpose.msra.mxu0 0.0
      %351 = vmatpush.xpose.msra.mxu0 0.0
      %352 = vmatpush.xpose.msra.mxu0 0.0
      %353 = vmatpush.xpose.msra.mxu0 %v336
      %354 = vmatmul.f32.gmra.mxu0 %v333
      %v355 = vpop.f32.mrf.mxu0
      %v356 = vadd.f32 0.0, %v355
      %357 = vdwg.mxu0
      %v358 = vmul.f32 %v356, 0.17677669
      %v359 = vld [vmem:[#allocation2] sm:$0xff]
      %vm360 = vcmask 64512
      %v361 = vsel %vm360, %v358, -inf
      %362 = vmax.xlane.f32.xlu0 %v361
      %v363 = vpop.xlane.xlu0 %362
      %v364 = vmax.f32 %v359, %v363
      %v365 = vsub.f32 %v359, %v364
      %v366 = vmul.f32 %v365, 1.442695
      %v367 = vpow.pop %v366
      %369 = vset.pattern.permute.xlu0 0
      %370 = vperm.xlu0 %369, %v364
      %v371 = vpop.permute.xlu0 %370
      %v373 = vsub.f32 %v358, %v371
      %v374 = vmul.f32 %v373, 1.442695
      %v375 = vpow.pop %v374
      %v376 = vld [vmem:[#allocation3] sm:$0xff]
      %v377 = vmul.f32 %v367, %v376
      %v378 = vsel %vm360, %v375, 0.0
      %379 = vadd.xlane.f32.xlu0 %v378
      %v380 = vpop.xlane.xlu0 %379
      %v381 = vadd.f32 %v377, %v380
      %vm382 = vcmask 7168
      %383 = vst.msk [vmem:[#allocation3] sm:$0xff] %vm382, %v381
      %v384 = vld [vmem:[#allocation4] sm:$0xff]
      %386 = vset.pattern.permute.xlu0 0
      %387 = vperm.xlu0 %386, %v367
      %v388 = vpop.permute.xlu0 %387
      %v390 = vmul.f32 %v388, %v384
      %v392 = vsel %vm360, %v375, 0
      %394 = vmatpush.msra.mxu0 0.0
      %395 = vmatpush.msra.mxu0 0.0
      %396 = vmatpush.msra.mxu0 0.0
      %397 = vmatpush.msra.mxu0 0.0
      %398 = vmatpush.msra.mxu0 0.0
      %399 = vmatpush.msra.mxu0 0.0
      %400 = vmatpush.msra.mxu0 0.0
      %401 = vmatpush.msra.mxu0 0.0
      %402 = vmatpush.msra.mxu0 0.0
      %403 = vmatpush.msra.mxu0 0.0
      %404 = vmatpush.msra.mxu0 0.0
      %405 = vmatpush.msra.mxu0 0.0
      %406 = vmatpush.msra.mxu0 0.0
      %407 = vmatpush.msra.mxu0 0.0
      %408 = vmatpush.msra.mxu0 0.0
      %409 = vmatpush.msra.mxu0 %v330
      %410 = vmatmul.f32.gmra.mxu0 %v392
      %v411 = vpop.f32.mrf.mxu0
      %v412 = vadd.f32 0.0, %v411
      %413 = vdwg.mxu0
      %v414 = vadd.f32 %v390, %v412
      %415 = vst.msk [vmem:[#allocation4] sm:$0xff] %vm331, %v414
      %416 = vst.msk [vmem:[#allocation2] sm:$0xff] %vm382, %v364
      // Predicated region
      $region37: #{self_attention_pallas.4} parent=31 // pred_check
        %p417 = pneg %p319
      $region38: #{self_attention_pallas.4} parent=31 // pred_check_branch
        %419 = sbr.rel (%p417) target = $region40
      $region39: #{self_attention_pallas.4} parent=31 // pred_region
        %v420 = vld [vmem:[#allocation4] sm:$0xff]
        %v421 = vld [vmem:[#allocation3] sm:$0xff]
        %v422 = vrcp.pop %v421
        %424 = vset.pattern.permute.xlu0 0
        %425 = vperm.xlu0 %424, %v422
        %v426 = vpop.permute.xlu0 %425
        %v428 = vmul.f32 %v420, %v426
        %429 = vst.msk [vmem:[%s318] sm:$0xff] %vm331, %v428
      $region40: #{self_attention_pallas.4} parent=31 // pred_fallthru
        _
      %p430 = scmp.lt.s32.totalorder %s20, 1
      %s431 = scalar_select %p430, %s20, 1
      %p432 = scmp.lt.s32.totalorder %s21, 3
      %s433 = scalar_select %p432, %s21, 3
      %p434 = scmp.lt.s32.totalorder %s22, 0
      %s435 = scalar_select %p434, %s22, 0
      %s436 = sadd.s32 %s435, %s433
      %s437 = smul.addr %s431, 4
      %s438 = sadd.s32 %s436, %s437
      %s439 = smul.addr %s438, 8
      %s440 = scalar_lea.vmem %s3, %s439
      // Predicated region
      $region41: #{self_attention_pallas.4} parent=31 // pred_check
        %p441 = pneg %p152
      $region42: #{self_attention_pallas.4} parent=31 // pred_check_branch
        %443 = sbr.rel (%p441) target = $region44
      $region43: #{self_attention_pallas.4} parent=31 // pred_region
        _
      $region44: #{self_attention_pallas.4} parent=31 // pred_fallthru
        _
    $region32: #{self_attention_pallas.4} parent=5 // pred_fallthru
      _
    %p444 = scmp.le.s32.totalorder 2, %s9
    // Predicated region
    $region45: #{self_attention_pallas.4} parent=5 // pred_check
      %p445 = pneg %p444
    $region46: #{self_attention_pallas.4} parent=5 // pred_check_branch
      %447 = sbr.rel (%p445) target = $region48
    $region47: #{self_attention_pallas.4} parent=5 // pred_region
      %s448 = ssub.s32 %s9, 2
      // Predicated region
      $region49: #{self_attention_pallas.4} parent=47 // pred_check
        %p449 = pneg %p158
      $region50: #{self_attention_pallas.4} parent=47 // pred_check_branch
        %451 = sbr.rel (%p449) target = $region52
      $region51: #{self_attention_pallas.4} parent=47 // pred_region
        %p452 = scmp.lt.s32.totalorder %s24, 1
        %s453 = scalar_select %p452, %s24, 1
        %p454 = scmp.lt.s32.totalorder %s25, 3
        %s455 = scalar_select %p454, %s25, 3
        %p456 = scmp.lt.s32.totalorder %s26, 0
        %s457 = scalar_select %p456, %s26, 0
        %s458 = sadd.s32 %s457, %s455
        %s459 = smul.addr %s453, 4
        %s460 = sadd.s32 %s458, %s459
        %s461 = smul.addr %s460, 8
        %s462 = scalar_lea.vmem %s3, %s461
      $region52: #{self_attention_pallas.4} parent=47 // pred_fallthru
        _
    $region48: #{self_attention_pallas.4} parent=5 // pred_fallthru
      _
  $region6: #{self_attention_pallas.4} parent=0 // loop_footer
    %s13 = sadd.s32 1, %s9
  $region7: #{self_attention_pallas.4} parent=0 // loop_footer_branch
    %8 = sbr.rel target = $region3
  $region8: #{self_attention_pallas.4} parent=0 // loop_exit
    _

// kernel: self_attention_pallas.5
$region0: #{self_attention_pallas.5}
  #allocation0 [shape = 'u32[]', space=smem, size = 0x4, offset = 0x4, fixed_abs, tag = 'smem constant byte address 0x4 - core index']
  #allocation1 [shape = 'u32[72,128]{1,0:T(1,128)}', space=vmem, size = 0x9000, scoped, tag = 'internal scratch']
  %s0 = inlined_call_operand.vmem [shape: f32[2,8,128], index: 0, kind: input, shape index: {}]
  %s1 = inlined_call_operand.vmem [shape: f32[128,128], index: 1, kind: input, shape index: {}]
  %s2 = inlined_call_operand.vmem [shape: f32[1,128], index: 2, kind: input, shape index: {}]
  %s3 = inlined_call_operand.hbm [shape: f32[2,8,128], index: 3, kind: output, shape index: {}]
  %s4 = sld [smem:[#allocation0]]
  $region45: #{self_attention_pallas.5} parent=0
    _
  %s6 = ssub.s32 1, %s4
  %s7 = scalar_select 0, %s6, %s4
  $region1: #{self_attention_pallas.5} parent=0
    #allocation2 [shape = 'u8[8192]{0}', space=vmem, size = 0x2000, scoped, tag = 'output window, operand 0']
    #allocation3 [shape = 's32[2]{0}', space=sflag, size = 0x8, scoped, tag = 'scoped memory for self_attention_pallas.5']
    %8 = vsyncpa [#allocation3], 0
    %s9 = scalar_lea.sflag [#allocation3], 1
    %10 = vsyncpa %s9, 0
    loop: start=0, step=1, limit=4
    $region2: #{self_attention_pallas.5} parent=1 // loop_pre_header
      _
    $region3: #{self_attention_pallas.5} parent=1 // loop_header
      %s12 = sphi 0, %s16
      %p13 = scmp.ge.s32.totalorder %s12, 4
      %s19 = sphi 0, %s31
      %s20 = sphi 0, %s27
      %s21 = sphi 0, %s19
      %s22 = sphi 0, %s20
      %s23 = sphi 0, %s21
      %s24 = sphi 0, %s22
      %s36 = sphi 0, %s38
      %s39 = sphi 0, %s36
      %s40 = sphi 0, %s39
      %s56 = sphi 0, %s40
      %s60 = sphi 0, %s60
      %s62 = sphi 0, %s60
      %s63 = sphi 0, %s62
      %s77 = sphi 0, %s63
      %s81 = sphi 0, %s81
      %s83 = sphi 0, %s81
      %s84 = sphi 0, %s83
      %s98 = sphi 0, %s84
      %s106 = sphi 0, %s108
      %s109 = sphi 0, %s106
      %s110 = sphi 0, %s109
      %s126 = sphi 0, %s110
    $region4: #{self_attention_pallas.5} parent=1 // loop_header_branch
      %15 = sbr.rel (%p13) target = $region8
    $region5: #{self_attention_pallas.5} parent=1 // loop_body
      %s17 = ssub.s32 %s12, 1
      %s18 = ssub.s32 %s12, 2
      %s25 = sadd.s32 1, %s20
      %p26 = scmp.ge.s32.totalorder %s25, 1
      %s27 = scalar_select %p26, 0, %s25
      %s28 = sadd.s32 1, %s19
      %s29 = scalar_select %p26, %s28, %s19
      %p30 = scmp.ge.s32.totalorder %s29, 2
      %s31 = scalar_select %p30, 0, %s29
      %s32 = ssub.s32 %s19, %s31
      %s33 = ssub.s32 %s20, %s27
      %s34 = sor.u32 %s32, %s33
      %p35 = scmp.eq.s32.totalorder %s34, 0
      %s37 = sadd.s32 %s36, 1
      %s38 = scalar_select %p35, %s36, %s37
      %p41 = pneg %p35
      %p42 = scmp.eq.s32.totalorder %s12, 1
      %p43 = por %p41, %p42
      %p44 = scmp.ne.s32.totalorder %s36, %s39
      %p45 = scmp.eq.s32.totalorder %s12, 0
      %p46 = por %p44, %p45
      %p47 = scmp.ne.s32.totalorder %s36, %s39
      %p48 = scmp.eq.s32.totalorder %s17, 1
      %p49 = por %p47, %p48
      %p50 = scmp.ne.s32.totalorder %s39, %s40
      %p51 = scmp.eq.s32.totalorder %s17, 0
      %p52 = por %p50, %p51
      %p53 = scmp.ne.s32.totalorder %s39, %s40
      %p54 = scmp.eq.s32.totalorder %s18, 1
      %p55 = por %p53, %p54
      %p57 = scmp.ne.s32.totalorder %s40, %s56
      %p58 = scmp.eq.s32.totalorder %s18, 0
      %p59 = por %p57, %p58
      %s61 = sadd.s32 %s60, 1
      %p64 = scmp.eq.s32.totalorder %s12, 1
      %p65 = scmp.ne.s32.totalorder %s60, %s62
      %p66 = scmp.eq.s32.totalorder %s12, 0
      %p67 = por %p65, %p66
      %p68 = scmp.ne.s32.totalorder %s60, %s62
      %p69 = scmp.eq.s32.totalorder %s17, 1
      %p70 = por %p68, %p69
      %p71 = scmp.ne.s32.totalorder %s62, %s63
      %p72 = scmp.eq.s32.totalorder %s17, 0
      %p73 = por %p71, %p72
      %p74 = scmp.ne.s32.totalorder %s62, %s63
      %p75 = scmp.eq.s32.totalorder %s18, 1
      %p76 = por %p74, %p75
      %p78 = scmp.ne.s32.totalorder %s63, %s77
      %p79 = scmp.eq.s32.totalorder %s18, 0
      %p80 = por %p78, %p79
      %s82 = sadd.s32 %s81, 1
      %p85 = scmp.eq.s32.totalorder %s12, 1
      %p86 = scmp.ne.s32.totalorder %s81, %s83
      %p87 = scmp.eq.s32.totalorder %s12, 0
      %p88 = por %p86, %p87
      %p89 = scmp.ne.s32.totalorder %s81, %s83
      %p90 = scmp.eq.s32.totalorder %s17, 1
      %p91 = por %p89, %p90
      %p92 = scmp.ne.s32.totalorder %s83, %s84
      %p93 = scmp.eq.s32.totalorder %s17, 0
      %p94 = por %p92, %p93
      %p95 = scmp.ne.s32.totalorder %s83, %s84
      %p96 = scmp.eq.s32.totalorder %s18, 1
      %p97 = por %p95, %p96
      %p99 = scmp.ne.s32.totalorder %s84, %s98
      %p100 = scmp.eq.s32.totalorder %s18, 0
      %p101 = por %p99, %p100
      %s102 = ssub.s32 %s19, %s31
      %s103 = ssub.s32 %s20, %s27
      %s104 = sor.u32 %s102, %s103
      %p105 = scmp.eq.s32.totalorder %s104, 0
      %s107 = sadd.s32 %s106, 1
      %s108 = scalar_select %p105, %s106, %s107
      %p111 = pneg %p105
      %p112 = scmp.eq.s32.totalorder %s12, 1
      %p113 = por %p111, %p112
      %p114 = scmp.ne.s32.totalorder %s106, %s109
      %p115 = scmp.eq.s32.totalorder %s12, 0
      %p116 = por %p114, %p115
      %p117 = scmp.ne.s32.totalorder %s106, %s109
      %p118 = scmp.eq.s32.totalorder %s17, 1
      %p119 = por %p117, %p118
      %p120 = scmp.ne.s32.totalorder %s109, %s110
      %p121 = scmp.eq.s32.totalorder %s17, 0
      %p122 = por %p120, %p121
      %p123 = scmp.ne.s32.totalorder %s109, %s110
      %p124 = scmp.eq.s32.totalorder %s18, 1
      %p125 = por %p123, %p124
      %p127 = scmp.ne.s32.totalorder %s110, %s126
      %p128 = scmp.eq.s32.totalorder %s18, 0
      %p129 = por %p127, %p128
      %p130 = scmp.le.s32.totalorder 1, %s12
      %p131 = scmp.lt.s32.totalorder %s12, 3
      %p132 = pnand %p130, %p131
      %p133 = pneg %p132
      // Predicated region
      $region9: #{self_attention_pallas.5} parent=5 // pred_check
        _
      $region10: #{self_attention_pallas.5} parent=5 // pred_check_branch
        %135 = sbr.rel (%p132) target = $region12
      $region11: #{self_attention_pallas.5} parent=5 // pred_region
        %s136 = ssub.s32 %s12, 1
        // Predicated region
        $region13: #{self_attention_pallas.5} parent=11 // pred_check
          %p137 = pneg %p73
        $region14: #{self_attention_pallas.5} parent=11 // pred_check_branch
          %139 = sbr.rel (%p137) target = $region16
        $region15: #{self_attention_pallas.5} parent=11 // pred_region
          _
        $region16: #{self_attention_pallas.5} parent=11 // pred_fallthru
          _
        // Predicated region
        $region17: #{self_attention_pallas.5} parent=11 // pred_check
          %p140 = pneg %p94
        $region18: #{self_attention_pallas.5} parent=11 // pred_check_branch
          %142 = sbr.rel (%p140) target = $region20
        $region19: #{self_attention_pallas.5} parent=11 // pred_region
          _
        $region20: #{self_attention_pallas.5} parent=11 // pred_fallthru
          _
      $region12: #{self_attention_pallas.5} parent=5 // pred_fallthru
        _
      %p143 = scmp.lt.s32.totalorder %s12, 2
      // Predicated region
      $region21: #{self_attention_pallas.5} parent=5 // pred_check
        %p144 = pneg %p143
      $region22: #{self_attention_pallas.5} parent=5 // pred_check_branch
        %146 = sbr.rel (%p144) target = $region24
      $region23: #{self_attention_pallas.5} parent=5 // pred_region
        // Predicated region
        $region25: #{self_attention_pallas.5} parent=23 // pred_check
          %p147 = pneg %p46
        $region26: #{self_attention_pallas.5} parent=23 // pred_check_branch
          %149 = sbr.rel (%p147) target = $region28
        $region27: #{self_attention_pallas.5} parent=23 // pred_region
          %p150 = scmp.lt.s32.totalorder %s19, 1
          %s151 = scalar_select %p150, %s19, 1
          %p152 = scmp.lt.s32.totalorder %s20, 0
          %s153 = scalar_select %p152, %s20, 0
          %s154 = sadd.s32 %s153, %s151
          %s155 = smul.addr %s154, 8
          %s156 = scalar_lea.vmem %s0, %s155
        $region28: #{self_attention_pallas.5} parent=23 // pred_fallthru
          _
      $region24: #{self_attention_pallas.5} parent=5 // pred_fallthru
        _
      %p157 = scmp.le.s32.totalorder 1, %s12
      %p158 = scmp.lt.s32.totalorder %s12, 3
      %p159 = pnand %p157, %p158
      %p160 = pneg %p159
      // Predicated region
      $region29: #{self_attention_pallas.5} parent=5 // pred_check
        _
      $region30: #{self_attention_pallas.5} parent=5 // pred_check_branch
        %162 = sbr.rel (%p159) target = $region32
      $region31: #{self_attention_pallas.5} parent=5 // pred_region
        %s163 = ssub.s32 %s12, 1
        %p164 = scmp.lt.s32.totalorder %s21, 1
        %s165 = scalar_select %p164, %s21, 1
        %p166 = scmp.lt.s32.totalorder %s22, 0
        %s167 = scalar_select %p166, %s22, 0
        %s168 = sadd.s32 %s167, %s165
        %s169 = smul.addr %s168, 8
        %s170 = scalar_lea.vmem %s0, %s169
        %p171 = pneg %p52
        %p172 = pneg %p49
        %p173 = pneg %p73
        %p174 = pneg %p70
        %p175 = pneg %p94
        %p176 = pneg %p91
        %p177 = pneg %p122
        %p178 = pneg %p119
        %s179 = sand.u32 %s109, 1
        %s180 = scalar_lea.sflag [#allocation3], %s179
        %s181 = sand.u32 %s109, 1
        %s182 = smul.addr %s181, 8
        %s183 = scalar_lea.vmem [#allocation2], %s182
        %p184 = scmp.lt.s32.totalorder %s21, 1
        %s185 = scalar_select %p184, %s21, 1
        %p186 = scmp.lt.s32.totalorder %s22, 0
        %s187 = scalar_select %p186, %s22, 0
        %s188 = sadd.s32 %s187, %s185
        %s189 = smul.addr %s188, 8
        %s190 = scalar_lea.vmem %s0, %s189
        %v191 = vld [vmem:[%s190] sm:$0xff]
        %v192 = vld [vmem:[%s1] sm:$0xff]
        %v193 = vld [vmem:[%s1 + $0x8] sm:$0xff]
        %v194 = vld [vmem:[%s1 + $0x10] sm:$0xff]
        %v195 = vld [vmem:[%s1 + $0x18] sm:$0xff]
        %v196 = vld [vmem:[%s1 + $0x20] sm:$0xff]
        %v197 = vld [vmem:[%s1 + $0x28] sm:$0xff]
        %v198 = vld [vmem:[%s1 + $0x30] sm:$0xff]
        %v199 = vld [vmem:[%s1 + $0x38] sm:$0xff]
        %v200 = vld [vmem:[%s1 + $0x40] sm:$0xff]
        %v201 = vld [vmem:[%s1 + $0x48] sm:$0xff]
        %v202 = vld [vmem:[%s1 + $0x50] sm:$0xff]
        %v203 = vld [vmem:[%s1 + $0x58] sm:$0xff]
        %v204 = vld [vmem:[%s1 + $0x60] sm:$0xff]
        %v205 = vld [vmem:[%s1 + $0x68] sm:$0xff]
        %v206 = vld [vmem:[%s1 + $0x70] sm:$0xff]
        %v207 = vld [vmem:[%s1 + $0x78] sm:$0xff]
        %v208 = vld [vmem:[%s2] sm:$0x1]
        %v210 = vperm.slane %v208, 0
        %212 = vmatpush.msra.mxu0 %v207
        %213 = vmatpush.msra.mxu0 %v206
        %214 = vmatpush.msra.mxu0 %v205
        %215 = vmatpush.msra.mxu0 %v204
        %216 = vmatpush.msra.mxu0 %v203
        %217 = vmatpush.msra.mxu0 %v202
        %218 = vmatpush.msra.mxu0 %v201
        %219 = vmatpush.msra.mxu0 %v200
        %220 = vmatpush.msra.mxu0 %v199
        %221 = vmatpush.msra.mxu0 %v198
        %222 = vmatpush.msra.mxu0 %v197
        %223 = vmatpush.msra.mxu0 %v196
        %224 = vmatpush.msra.mxu0 %v195
        %225 = vmatpush.msra.mxu0 %v194
        %226 = vmatpush.msra.mxu0 %v193
        %227 = vmatpush.msra.mxu0 %v192
        %228 = vmatmul.f32.gmra.mxu0 %v191
        %v229 = vpop.f32.mrf.mxu0
        %v230 = vadd.f32 %v210, %v229
        %231 = vdwg.mxu0
        %232 = vst [vmem:[%s183] sm:$0xff] %v230
        %s233 = sand.u32 %s109, 1
        %s234 = scalar_lea.sflag [#allocation3], %s233
        %s235 = sand.u32 %s109, 1
        %s236 = smul.addr %s235, 8
        %s237 = scalar_lea.vmem [#allocation2], %s236
        // Predicated region
        $region33: #{self_attention_pallas.5} parent=31 // pred_check
          %p238 = pneg %p119
        $region34: #{self_attention_pallas.5} parent=31 // pred_check_branch
          %240 = sbr.rel (%p238) target = $region36
        $region35: #{self_attention_pallas.5} parent=31 // pred_region
          %242 = vsyncadd %s234, 0
          %s243 = sadd.s32 %s22, %s21
          %s244 = smul.addr %s243, 8
          %s245 = scalar_lea.hbm %s3, %s244
          %s247 = sshll.u32 %s237, 4
          %s248 = int_to_ptr.vmem [resolvable:$true] %s247
          %s249 = sshll.u32 %s245, 4
          %s250 = int_to_ptr.hbm [resolvable:$true] %s249
          %252 = dma.vmem_to_hbm [thread:$0]  %s248, 128, %s250, %s234
        $region36: #{self_attention_pallas.5} parent=31 // pred_fallthru
          _
      $region32: #{self_attention_pallas.5} parent=5 // pred_fallthru
        _
      %p253 = scmp.le.s32.totalorder 2, %s12
      // Predicated region
      $region37: #{self_attention_pallas.5} parent=5 // pred_check
        %p254 = pneg %p253
      $region38: #{self_attention_pallas.5} parent=5 // pred_check_branch
        %256 = sbr.rel (%p254) target = $region40
      $region39: #{self_attention_pallas.5} parent=5 // pred_region
        %s257 = ssub.s32 %s12, 2
        // Predicated region
        $region41: #{self_attention_pallas.5} parent=39 // pred_check
          %p258 = pneg %p125
        $region42: #{self_attention_pallas.5} parent=39 // pred_check_branch
          %260 = sbr.rel (%p258) target = $region44
        $region43: #{self_attention_pallas.5} parent=39 // pred_region
          %s261 = sand.u32 %s110, 1
          %s262 = scalar_lea.sflag [#allocation3], %s261
          %s263 = sand.u32 %s110, 1
          %s264 = smul.addr %s263, 8
          %s265 = scalar_lea.vmem [#allocation2], %s264
          %267 = dma.done %s262, 128
        $region44: #{self_attention_pallas.5} parent=39 // pred_fallthru
          _
      $region40: #{self_attention_pallas.5} parent=5 // pred_fallthru
        _
    $region6: #{self_attention_pallas.5} parent=1 // loop_footer
      %s16 = sadd.s32 1, %s12
    $region7: #{self_attention_pallas.5} parent=1 // loop_footer_branch
      %11 = sbr.rel target = $region3
    $region8: #{self_attention_pallas.5} parent=1 // loop_exit
      _
    %268 = vsyncpa [#allocation3], 1
    %s269 = scalar_lea.sflag [#allocation3], 1
    %270 = vsyncpa %s269, 1

// kernel: self_attention_pallas.3
$region0: #{self_attention_pallas.3}
  #allocation0 [shape = 'u32[]', space=smem, size = 0x4, offset = 0x4, fixed_abs, tag = 'smem constant byte address 0x4 - core index']
  #allocation1 [shape = 'u32[72,128]{1,0:T(1,128)}', space=vmem, size = 0x9000, scoped, tag = 'internal scratch']
  %s0 = inlined_call_operand.vmem [shape: f32[2,8,128], index: 0, kind: input, shape index: {}]
  %s1 = inlined_call_operand.vmem [shape: f32[128,128], index: 1, kind: input, shape index: {}]
  %s2 = inlined_call_operand.vmem [shape: f32[1,128], index: 2, kind: input, shape index: {}]
  %s3 = inlined_call_operand.vmem [shape: f32[128,128], index: 3, kind: input, shape index: {}]
  %s4 = inlined_call_operand.vmem [shape: f32[1,128], index: 4, kind: input, shape index: {}]
  %s5 = inlined_call_operand.vmem [shape: f32[128,128], index: 5, kind: input, shape index: {}]
  %s6 = inlined_call_operand.vmem [shape: f32[1,128], index: 6, kind: input, shape index: {}]
  %s7 = inlined_call_operand.vmem [shape: f32[1,128], index: 7, kind: input, shape index: {}]
  %s8 = inlined_call_operand.vmem [shape: f32[1,128], index: 8, kind: input, shape index: {}]
  %s9 = inlined_call_operand.vmem [shape: f32[8,128], index: 9, kind: input, shape index: {}]
  %s10 = inlined_call_operand.vmem [shape: f32[8,128], index: 10, kind: input, shape index: {}]
  %s11 = inlined_call_operand.vmem [shape: f32[2,8,128], index: 11, kind: output, shape index: {0}]
  %s12 = inlined_call_operand.vmem [shape: f32[2,8,128], index: 12, kind: output, shape index: {1}]
  %s13 = inlined_call_operand.vmem [shape: f32[2,8,128], index: 13, kind: output, shape index: {2}]
  %14 = xla_tuple %s11, %s12, %s13
  %s15 = sld [smem:[#allocation0]]
  $region93: #{self_attention_pallas.3} parent=0
    _
  %s17 = ssub.s32 1, %s15
  %s18 = scalar_select 0, %s17, %s15
  loop: start=0, step=1, limit=4
  $region2: #{self_attention_pallas.3} parent=0 // loop_pre_header
    _
  $region3: #{self_attention_pallas.3} parent=0 // loop_header
    %s20 = sphi 0, %s24
    %p21 = scmp.ge.s32.totalorder %s20, 4
    %s27 = sphi 0, %s39
    %s28 = sphi 0, %s35
    %s29 = sphi 0, %s27
    %s30 = sphi 0, %s28
    %s31 = sphi 0, %s29
    %s32 = sphi 0, %s30
    %s44 = sphi 0, %s46
    %s47 = sphi 0, %s44
    %s48 = sphi 0, %s47
    %s64 = sphi 0, %s48
    %s68 = sphi 0, %s68
    %s70 = sphi 0, %s68
    %s71 = sphi 0, %s70
    %s85 = sphi 0, %s71
    %s89 = sphi 0, %s89
    %s91 = sphi 0, %s89
    %s92 = sphi 0, %s91
    %s106 = sphi 0, %s92
    %s110 = sphi 0, %s110
    %s112 = sphi 0, %s110
    %s113 = sphi 0, %s112
    %s127 = sphi 0, %s113
    %s131 = sphi 0, %s131
    %s133 = sphi 0, %s131
    %s134 = sphi 0, %s133
    %s148 = sphi 0, %s134
    %s152 = sphi 0, %s152
    %s154 = sphi 0, %s152
    %s155 = sphi 0, %s154
    %s169 = sphi 0, %s155
    %s173 = sphi 0, %s173
    %s175 = sphi 0, %s173
    %s176 = sphi 0, %s175
    %s190 = sphi 0, %s176
    %s194 = sphi 0, %s194
    %s196 = sphi 0, %s194
    %s197 = sphi 0, %s196
    %s211 = sphi 0, %s197
    %s215 = sphi 0, %s215
    %s217 = sphi 0, %s215
    %s218 = sphi 0, %s217
    %s232 = sphi 0, %s218
    %s238 = sphi 0, %s240
    %s241 = sphi 0, %s238
    %s242 = sphi 0, %s241
    %s258 = sphi 0, %s242
    %s264 = sphi 0, %s266
    %s267 = sphi 0, %s264
    %s268 = sphi 0, %s267
    %s284 = sphi 0, %s268
    %s292 = sphi 0, %s294
    %s295 = sphi 0, %s292
    %s296 = sphi 0, %s295
    %s312 = sphi 0, %s296
    %s320 = sphi 0, %s322
    %s323 = sphi 0, %s320
    %s324 = sphi 0, %s323
    %s340 = sphi 0, %s324
    %s348 = sphi 0, %s350
    %s351 = sphi 0, %s348
    %s352 = sphi 0, %s351
    %s368 = sphi 0, %s352
  $region4: #{self_attention_pallas.3} parent=0 // loop_header_branch
    %23 = sbr.rel (%p21) target = $region8
  $region5: #{self_attention_pallas.3} parent=0 // loop_body
    %s25 = ssub.s32 %s20, 1
    %s26 = ssub.s32 %s20, 2
    %s33 = sadd.s32 1, %s28
    %p34 = scmp.ge.s32.totalorder %s33, 1
    %s35 = scalar_select %p34, 0, %s33
    %s36 = sadd.s32 1, %s27
    %s37 = scalar_select %p34, %s36, %s27
    %p38 = scmp.ge.s32.totalorder %s37, 2
    %s39 = scalar_select %p38, 0, %s37
    %s40 = ssub.s32 %s27, %s39
    %s41 = ssub.s32 %s28, %s35
    %s42 = sor.u32 %s40, %s41
    %p43 = scmp.eq.s32.totalorder %s42, 0
    %s45 = sadd.s32 %s44, 1
    %s46 = scalar_select %p43, %s44, %s45
    %p49 = pneg %p43
    %p50 = scmp.eq.s32.totalorder %s20, 1
    %p51 = por %p49, %p50
    %p52 = scmp.ne.s32.totalorder %s44, %s47
    %p53 = scmp.eq.s32.totalorder %s20, 0
    %p54 = por %p52, %p53
    %p55 = scmp.ne.s32.totalorder %s44, %s47
    %p56 = scmp.eq.s32.totalorder %s25, 1
    %p57 = por %p55, %p56
    %p58 = scmp.ne.s32.totalorder %s47, %s48
    %p59 = scmp.eq.s32.totalorder %s25, 0
    %p60 = por %p58, %p59
    %p61 = scmp.ne.s32.totalorder %s47, %s48
    %p62 = scmp.eq.s32.totalorder %s26, 1
    %p63 = por %p61, %p62
    %p65 = scmp.ne.s32.totalorder %s48, %s64
    %p66 = scmp.eq.s32.totalorder %s26, 0
    %p67 = por %p65, %p66
    %s69 = sadd.s32 %s68, 1
    %p72 = scmp.eq.s32.totalorder %s20, 1
    %p73 = scmp.ne.s32.totalorder %s68, %s70
    %p74 = scmp.eq.s32.totalorder %s20, 0
    %p75 = por %p73, %p74
    %p76 = scmp.ne.s32.totalorder %s68, %s70
    %p77 = scmp.eq.s32.totalorder %s25, 1
    %p78 = por %p76, %p77
    %p79 = scmp.ne.s32.totalorder %s70, %s71
    %p80 = scmp.eq.s32.totalorder %s25, 0
    %p81 = por %p79, %p80
    %p82 = scmp.ne.s32.totalorder %s70, %s71
    %p83 = scmp.eq.s32.totalorder %s26, 1
    %p84 = por %p82, %p83
    %p86 = scmp.ne.s32.totalorder %s71, %s85
    %p87 = scmp.eq.s32.totalorder %s26, 0
    %p88 = por %p86, %p87
    %s90 = sadd.s32 %s89, 1
    %p93 = scmp.eq.s32.totalorder %s20, 1
    %p94 = scmp.ne.s32.totalorder %s89, %s91
    %p95 = scmp.eq.s32.totalorder %s20, 0
    %p96 = por %p94, %p95
    %p97 = scmp.ne.s32.totalorder %s89, %s91
    %p98 = scmp.eq.s32.totalorder %s25, 1
    %p99 = por %p97, %p98
    %p100 = scmp.ne.s32.totalorder %s91, %s92
    %p101 = scmp.eq.s32.totalorder %s25, 0
    %p102 = por %p100, %p101
    %p103 = scmp.ne.s32.totalorder %s91, %s92
    %p104 = scmp.eq.s32.totalorder %s26, 1
    %p105 = por %p103, %p104
    %p107 = scmp.ne.s32.totalorder %s92, %s106
    %p108 = scmp.eq.s32.totalorder %s26, 0
    %p109 = por %p107, %p108
    %s111 = sadd.s32 %s110, 1
    %p114 = scmp.eq.s32.totalorder %s20, 1
    %p115 = scmp.ne.s32.totalorder %s110, %s112
    %p116 = scmp.eq.s32.totalorder %s20, 0
    %p117 = por %p115, %p116
    %p118 = scmp.ne.s32.totalorder %s110, %s112
    %p119 = scmp.eq.s32.totalorder %s25, 1
    %p120 = por %p118, %p119
    %p121 = scmp.ne.s32.totalorder %s112, %s113
    %p122 = scmp.eq.s32.totalorder %s25, 0
    %p123 = por %p121, %p122
    %p124 = scmp.ne.s32.totalorder %s112, %s113
    %p125 = scmp.eq.s32.totalorder %s26, 1
    %p126 = por %p124, %p125
    %p128 = scmp.ne.s32.totalorder %s113, %s127
    %p129 = scmp.eq.s32.totalorder %s26, 0
    %p130 = por %p128, %p129
    %s132 = sadd.s32 %s131, 1
    %p135 = scmp.eq.s32.totalorder %s20, 1
    %p136 = scmp.ne.s32.totalorder %s131, %s133
    %p137 = scmp.eq.s32.totalorder %s20, 0
    %p138 = por %p136, %p137
    %p139 = scmp.ne.s32.totalorder %s131, %s133
    %p140 = scmp.eq.s32.totalorder %s25, 1
    %p141 = por %p139, %p140
    %p142 = scmp.ne.s32.totalorder %s133, %s134
    %p143 = scmp.eq.s32.totalorder %s25, 0
    %p144 = por %p142, %p143
    %p145 = scmp.ne.s32.totalorder %s133, %s134
    %p146 = scmp.eq.s32.totalorder %s26, 1
    %p147 = por %p145, %p146
    %p149 = scmp.ne.s32.totalorder %s134, %s148
    %p150 = scmp.eq.s32.totalorder %s26, 0
    %p151 = por %p149, %p150
    %s153 = sadd.s32 %s152, 1
    %p156 = scmp.eq.s32.totalorder %s20, 1
    %p157 = scmp.ne.s32.totalorder %s152, %s154
    %p158 = scmp.eq.s32.totalorder %s20, 0
    %p159 = por %p157, %p158
    %p160 = scmp.ne.s32.totalorder %s152, %s154
    %p161 = scmp.eq.s32.totalorder %s25, 1
    %p162 = por %p160, %p161
    %p163 = scmp.ne.s32.totalorder %s154, %s155
    %p164 = scmp.eq.s32.totalorder %s25, 0
    %p165 = por %p163, %p164
    %p166 = scmp.ne.s32.totalorder %s154, %s155
    %p167 = scmp.eq.s32.totalorder %s26, 1
    %p168 = por %p166, %p167
    %p170 = scmp.ne.s32.totalorder %s155, %s169
    %p171 = scmp.eq.s32.totalorder %s26, 0
    %p172 = por %p170, %p171
    %s174 = sadd.s32 %s173, 1
    %p177 = scmp.eq.s32.totalorder %s20, 1
    %p178 = scmp.ne.s32.totalorder %s173, %s175
    %p179 = scmp.eq.s32.totalorder %s20, 0
    %p180 = por %p178, %p179
    %p181 = scmp.ne.s32.totalorder %s173, %s175
    %p182 = scmp.eq.s32.totalorder %s25, 1
    %p183 = por %p181, %p182
    %p184 = scmp.ne.s32.totalorder %s175, %s176
    %p185 = scmp.eq.s32.totalorder %s25, 0
    %p186 = por %p184, %p185
    %p187 = scmp.ne.s32.totalorder %s175, %s176
    %p188 = scmp.eq.s32.totalorder %s26, 1
    %p189 = por %p187, %p188
    %p191 = scmp.ne.s32.totalorder %s176, %s190
    %p192 = scmp.eq.s32.totalorder %s26, 0
    %p193 = por %p191, %p192
    %s195 = sadd.s32 %s194, 1
    %p198 = scmp.eq.s32.totalorder %s20, 1
    %p199 = scmp.ne.s32.totalorder %s194, %s196
    %p200 = scmp.eq.s32.totalorder %s20, 0
    %p201 = por %p199, %p200
    %p202 = scmp.ne.s32.totalorder %s194, %s196
    %p203 = scmp.eq.s32.totalorder %s25, 1
    %p204 = por %p202, %p203
    %p205 = scmp.ne.s32.totalorder %s196, %s197
    %p206 = scmp.eq.s32.totalorder %s25, 0
    %p207 = por %p205, %p206
    %p208 = scmp.ne.s32.totalorder %s196, %s197
    %p209 = scmp.eq.s32.totalorder %s26, 1
    %p210 = por %p208, %p209
    %p212 = scmp.ne.s32.totalorder %s197, %s211
    %p213 = scmp.eq.s32.totalorder %s26, 0
    %p214 = por %p212, %p213
    %s216 = sadd.s32 %s215, 1
    %p219 = scmp.eq.s32.totalorder %s20, 1
    %p220 = scmp.ne.s32.totalorder %s215, %s217
    %p221 = scmp.eq.s32.totalorder %s20, 0
    %p222 = por %p220, %p221
    %p223 = scmp.ne.s32.totalorder %s215, %s217
    %p224 = scmp.eq.s32.totalorder %s25, 1
    %p225 = por %p223, %p224
    %p226 = scmp.ne.s32.totalorder %s217, %s218
    %p227 = scmp.eq.s32.totalorder %s25, 0
    %p228 = por %p226, %p227
    %p229 = scmp.ne.s32.totalorder %s217, %s218
    %p230 = scmp.eq.s32.totalorder %s26, 1
    %p231 = por %p229, %p230
    %p233 = scmp.ne.s32.totalorder %s218, %s232
    %p234 = scmp.eq.s32.totalorder %s26, 0
    %p235 = por %p233, %p234
    %s236 = ssub.s32 %s28, %s35
    %p237 = scmp.eq.s32.totalorder %s236, 0
    %s239 = sadd.s32 %s238, 1
    %s240 = scalar_select %p237, %s238, %s239
    %p243 = pneg %p237
    %p244 = scmp.eq.s32.totalorder %s20, 1
    %p245 = por %p243, %p244
    %p246 = scmp.ne.s32.totalorder %s238, %s241
    %p247 = scmp.eq.s32.totalorder %s20, 0
    %p248 = por %p246, %p247
    %p249 = scmp.ne.s32.totalorder %s238, %s241
    %p250 = scmp.eq.s32.totalorder %s25, 1
    %p251 = por %p249, %p250
    %p252 = scmp.ne.s32.totalorder %s241, %s242
    %p253 = scmp.eq.s32.totalorder %s25, 0
    %p254 = por %p252, %p253
    %p255 = scmp.ne.s32.totalorder %s241, %s242
    %p256 = scmp.eq.s32.totalorder %s26, 1
    %p257 = por %p255, %p256
    %p259 = scmp.ne.s32.totalorder %s242, %s258
    %p260 = scmp.eq.s32.totalorder %s26, 0
    %p261 = por %p259, %p260
    %s262 = ssub.s32 %s28, %s35
    %p263 = scmp.eq.s32.totalorder %s262, 0
    %s265 = sadd.s32 %s264, 1
    %s266 = scalar_select %p263, %s264, %s265
    %p269 = pneg %p263
    %p270 = scmp.eq.s32.totalorder %s20, 1
    %p271 = por %p269, %p270
    %p272 = scmp.ne.s32.totalorder %s264, %s267
    %p273 = scmp.eq.s32.totalorder %s20, 0
    %p274 = por %p272, %p273
    %p275 = scmp.ne.s32.totalorder %s264, %s267
    %p276 = scmp.eq.s32.totalorder %s25, 1
    %p277 = por %p275, %p276
    %p278 = scmp.ne.s32.totalorder %s267, %s268
    %p279 = scmp.eq.s32.totalorder %s25, 0
    %p280 = por %p278, %p279
    %p281 = scmp.ne.s32.totalorder %s267, %s268
    %p282 = scmp.eq.s32.totalorder %s26, 1
    %p283 = por %p281, %p282
    %p285 = scmp.ne.s32.totalorder %s268, %s284
    %p286 = scmp.eq.s32.totalorder %s26, 0
    %p287 = por %p285, %p286
    %s288 = ssub.s32 %s27, %s39
    %s289 = ssub.s32 %s28, %s35
    %s290 = sor.u32 %s288, %s289
    %p291 = scmp.eq.s32.totalorder %s290, 0
    %s293 = sadd.s32 %s292, 1
    %s294 = scalar_select %p291, %s292, %s293
    %p297 = pneg %p291
    %p298 = scmp.eq.s32.totalorder %s20, 1
    %p299 = por %p297, %p298
    %p300 = scmp.ne.s32.totalorder %s292, %s295
    %p301 = scmp.eq.s32.totalorder %s20, 0
    %p302 = por %p300, %p301
    %p303 = scmp.ne.s32.totalorder %s292, %s295
    %p304 = scmp.eq.s32.totalorder %s25, 1
    %p305 = por %p303, %p304
    %p306 = scmp.ne.s32.totalorder %s295, %s296
    %p307 = scmp.eq.s32.totalorder %s25, 0
    %p308 = por %p306, %p307
    %p309 = scmp.ne.s32.totalorder %s295, %s296
    %p310 = scmp.eq.s32.totalorder %s26, 1
    %p311 = por %p309, %p310
    %p313 = scmp.ne.s32.totalorder %s296, %s312
    %p314 = scmp.eq.s32.totalorder %s26, 0
    %p315 = por %p313, %p314
    %s316 = ssub.s32 %s27, %s39
    %s317 = ssub.s32 %s28, %s35
    %s318 = sor.u32 %s316, %s317
    %p319 = scmp.eq.s32.totalorder %s318, 0
    %s321 = sadd.s32 %s320, 1
    %s322 = scalar_select %p319, %s320, %s321
    %p325 = pneg %p319
    %p326 = scmp.eq.s32.totalorder %s20, 1
    %p327 = por %p325, %p326
    %p328 = scmp.ne.s32.totalorder %s320, %s323
    %p329 = scmp.eq.s32.totalorder %s20, 0
    %p330 = por %p328, %p329
    %p331 = scmp.ne.s32.totalorder %s320, %s323
    %p332 = scmp.eq.s32.totalorder %s25, 1
    %p333 = por %p331, %p332
    %p334 = scmp.ne.s32.totalorder %s323, %s324
    %p335 = scmp.eq.s32.totalorder %s25, 0
    %p336 = por %p334, %p335
    %p337 = scmp.ne.s32.totalorder %s323, %s324
    %p338 = scmp.eq.s32.totalorder %s26, 1
    %p339 = por %p337, %p338
    %p341 = scmp.ne.s32.totalorder %s324, %s340
    %p342 = scmp.eq.s32.totalorder %s26, 0
    %p343 = por %p341, %p342
    %s344 = ssub.s32 %s27, %s39
    %s345 = ssub.s32 %s28, %s35
    %s346 = sor.u32 %s344, %s345
    %p347 = scmp.eq.s32.totalorder %s346, 0
    %s349 = sadd.s32 %s348, 1
    %s350 = scalar_select %p347, %s348, %s349
    %p353 = pneg %p347
    %p354 = scmp.eq.s32.totalorder %s20, 1
    %p355 = por %p353, %p354
    %p356 = scmp.ne.s32.totalorder %s348, %s351
    %p357 = scmp.eq.s32.totalorder %s20, 0
    %p358 = por %p356, %p357
    %p359 = scmp.ne.s32.totalorder %s348, %s351
    %p360 = scmp.eq.s32.totalorder %s25, 1
    %p361 = por %p359, %p360
    %p362 = scmp.ne.s32.totalorder %s351, %s352
    %p363 = scmp.eq.s32.totalorder %s25, 0
    %p364 = por %p362, %p363
    %p365 = scmp.ne.s32.totalorder %s351, %s352
    %p366 = scmp.eq.s32.totalorder %s26, 1
    %p367 = por %p365, %p366
    %p369 = scmp.ne.s32.totalorder %s352, %s368
    %p370 = scmp.eq.s32.totalorder %s26, 0
    %p371 = por %p369, %p370
    %p372 = scmp.le.s32.totalorder 1, %s20
    %p373 = scmp.lt.s32.totalorder %s20, 3
    %p374 = pnand %p372, %p373
    %p375 = pneg %p374
    // Predicated region
    $region9: #{self_attention_pallas.3} parent=5 // pred_check
      _
    $region10: #{self_attention_pallas.3} parent=5 // pred_check_branch
      %377 = sbr.rel (%p374) target = $region12
    $region11: #{self_attention_pallas.3} parent=5 // pred_region
      %s378 = ssub.s32 %s20, 1
      // Predicated region
      $region13: #{self_attention_pallas.3} parent=11 // pred_check
        %p379 = pneg %p81
      $region14: #{self_attention_pallas.3} parent=11 // pred_check_branch
        %381 = sbr.rel (%p379) target = $region16
      $region15: #{self_attention_pallas.3} parent=11 // pred_region
        _
      $region16: #{self_attention_pallas.3} parent=11 // pred_fallthru
        _
      // Predicated region
      $region17: #{self_attention_pallas.3} parent=11 // pred_check
        %p382 = pneg %p102
      $region18: #{self_attention_pallas.3} parent=11 // pred_check_branch
        %384 = sbr.rel (%p382) target = $region20
      $region19: #{self_attention_pallas.3} parent=11 // pred_region
        _
      $region20: #{self_attention_pallas.3} parent=11 // pred_fallthru
        _
      // Predicated region
      $region21: #{self_attention_pallas.3} parent=11 // pred_check
        %p385 = pneg %p123
      $region22: #{self_attention_pallas.3} parent=11 // pred_check_branch
        %387 = sbr.rel (%p385) target = $region24
      $region23: #{self_attention_pallas.3} parent=11 // pred_region
        _
      $region24: #{self_attention_pallas.3} parent=11 // pred_fallthru
        _
      // Predicated region
      $region25: #{self_attention_pallas.3} parent=11 // pred_check
        %p388 = pneg %p144
      $region26: #{self_attention_pallas.3} parent=11 // pred_check_branch
        %390 = sbr.rel (%p388) target = $region28
      $region27: #{self_attention_pallas.3} parent=11 // pred_region
        _
      $region28: #{self_attention_pallas.3} parent=11 // pred_fallthru
        _
      // Predicated region
      $region29: #{self_attention_pallas.3} parent=11 // pred_check
        %p391 = pneg %p165
      $region30: #{self_attention_pallas.3} parent=11 // pred_check_branch
        %393 = sbr.rel (%p391) target = $region32
      $region31: #{self_attention_pallas.3} parent=11 // pred_region
        _
      $region32: #{self_attention_pallas.3} parent=11 // pred_fallthru
        _
      // Predicated region
      $region33: #{self_attention_pallas.3} parent=11 // pred_check
        %p394 = pneg %p186
      $region34: #{self_attention_pallas.3} parent=11 // pred_check_branch
        %396 = sbr.rel (%p394) target = $region36
      $region35: #{self_attention_pallas.3} parent=11 // pred_region
        _
      $region36: #{self_attention_pallas.3} parent=11 // pred_fallthru
        _
      // Predicated region
      $region37: #{self_attention_pallas.3} parent=11 // pred_check
        %p397 = pneg %p207
      $region38: #{self_attention_pallas.3} parent=11 // pred_check_branch
        %399 = sbr.rel (%p397) target = $region40
      $region39: #{self_attention_pallas.3} parent=11 // pred_region
        _
      $region40: #{self_attention_pallas.3} parent=11 // pred_fallthru
        _
      // Predicated region
      $region41: #{self_attention_pallas.3} parent=11 // pred_check
        %p400 = pneg %p228
      $region42: #{self_attention_pallas.3} parent=11 // pred_check_branch
        %402 = sbr.rel (%p400) target = $region44
      $region43: #{self_attention_pallas.3} parent=11 // pred_region
        _
      $region44: #{self_attention_pallas.3} parent=11 // pred_fallthru
        _
      // Predicated region
      $region45: #{self_attention_pallas.3} parent=11 // pred_check
        %p403 = pneg %p254
      $region46: #{self_attention_pallas.3} parent=11 // pred_check_branch
        %405 = sbr.rel (%p403) target = $region48
      $region47: #{self_attention_pallas.3} parent=11 // pred_region
        %p406 = scmp.lt.s32.totalorder %s30, 0
        %s407 = scalar_select %p406, %s30, 0
        %s408 = smul.addr %s407, 8
        %s409 = scalar_lea.vmem %s9, %s408
      $region48: #{self_attention_pallas.3} parent=11 // pred_fallthru
        _
      // Predicated region
      $region49: #{self_attention_pallas.3} parent=11 // pred_check
        %p410 = pneg %p280
      $region50: #{self_attention_pallas.3} parent=11 // pred_check_branch
        %412 = sbr.rel (%p410) target = $region52
      $region51: #{self_attention_pallas.3} parent=11 // pred_region
        %p413 = scmp.lt.s32.totalorder %s30, 0
        %s414 = scalar_select %p413, %s30, 0
        %s415 = smul.addr %s414, 8
        %s416 = scalar_lea.vmem %s10, %s415
      $region52: #{self_attention_pallas.3} parent=11 // pred_fallthru
        _
    $region12: #{self_attention_pallas.3} parent=5 // pred_fallthru
      _
    %p417 = scmp.lt.s32.totalorder %s20, 2
    // Predicated region
    $region53: #{self_attention_pallas.3} parent=5 // pred_check
      %p418 = pneg %p417
    $region54: #{self_attention_pallas.3} parent=5 // pred_check_branch
      %420 = sbr.rel (%p418) target = $region56
    $region55: #{self_attention_pallas.3} parent=5 // pred_region
      // Predicated region
      $region57: #{self_attention_pallas.3} parent=55 // pred_check
        %p421 = pneg %p54
      $region58: #{self_attention_pallas.3} parent=55 // pred_check_branch
        %423 = sbr.rel (%p421) target = $region60
      $region59: #{self_attention_pallas.3} parent=55 // pred_region
        %p424 = scmp.lt.s32.totalorder %s27, 1
        %s425 = scalar_select %p424, %s27, 1
        %p426 = scmp.lt.s32.totalorder %s28, 0
        %s427 = scalar_select %p426, %s28, 0
        %s428 = sadd.s32 %s427, %s425
        %s429 = smul.addr %s428, 8
        %s430 = scalar_lea.vmem %s0, %s429
      $region60: #{self_attention_pallas.3} parent=55 // pred_fallthru
        _
    $region56: #{self_attention_pallas.3} parent=5 // pred_fallthru
      _
    %p431 = scmp.le.s32.totalorder 1, %s20
    %p432 = scmp.lt.s32.totalorder %s20, 3
    %p433 = pnand %p431, %p432
    %p434 = pneg %p433
    // Predicated region
    $region61: #{self_attention_pallas.3} parent=5 // pred_check
      _
    $region62: #{self_attention_pallas.3} parent=5 // pred_check_branch
      %436 = sbr.rel (%p433) target = $region64
    $region63: #{self_attention_pallas.3} parent=5 // pred_region
      %s437 = ssub.s32 %s20, 1
      %p438 = scmp.lt.s32.totalorder %s29, 1
      %s439 = scalar_select %p438, %s29, 1
      %p440 = scmp.lt.s32.totalorder %s30, 0
      %s441 = scalar_select %p440, %s30, 0
      %s442 = sadd.s32 %s441, %s439
      %s443 = smul.addr %s442, 8
      %s444 = scalar_lea.vmem %s0, %s443
      %p445 = pneg %p60
      %p446 = pneg %p57
      %p447 = pneg %p81
      %p448 = pneg %p78
      %p449 = pneg %p102
      %p450 = pneg %p99
      %p451 = pneg %p123
      %p452 = pneg %p120
      %p453 = pneg %p144
      %p454 = pneg %p141
      %p455 = pneg %p165
      %p456 = pneg %p162
      %p457 = pneg %p186
      %p458 = pneg %p183
      %p459 = pneg %p207
      %p460 = pneg %p204
      %p461 = pneg %p228
      %p462 = pneg %p225
      %p463 = scmp.lt.s32.totalorder %s30, 0
      %s464 = scalar_select %p463, %s30, 0
      %s465 = smul.addr %s464, 8
      %s466 = scalar_lea.vmem %s9, %s465
      %p467 = pneg %p254
      %p468 = pneg %p251
      %p469 = scmp.lt.s32.totalorder %s30, 0
      %s470 = scalar_select %p469, %s30, 0
      %s471 = smul.addr %s470, 8
      %s472 = scalar_lea.vmem %s10, %s471
      %p473 = pneg %p280
      %p474 = pneg %p277
      %p475 = pneg %p308
      %p476 = pneg %p305
      %p477 = scmp.lt.s32.totalorder %s29, 1
      %s478 = scalar_select %p477, %s29, 1
      %p479 = scmp.lt.s32.totalorder %s30, 0
      %s480 = scalar_select %p479, %s30, 0
      %s481 = sadd.s32 %s480, %s478
      %s482 = smul.addr %s481, 8
      %s483 = scalar_lea.vmem %s11, %s482
      %p484 = pneg %p336
      %p485 = pneg %p333
      %p486 = scmp.lt.s32.totalorder %s29, 1
      %s487 = scalar_select %p486, %s29, 1
      %p488 = scmp.lt.s32.totalorder %s30, 0
      %s489 = scalar_select %p488, %s30, 0
      %s490 = sadd.s32 %s489, %s487
      %s491 = smul.addr %s490, 8
      %s492 = scalar_lea.vmem %s12, %s491
      %p493 = pneg %p364
      %p494 = pneg %p361
      %p495 = scmp.lt.s32.totalorder %s29, 1
      %s496 = scalar_select %p495, %s29, 1
      %p497 = scmp.lt.s32.totalorder %s30, 0
      %s498 = scalar_select %p497, %s30, 0
      %s499 = sadd.s32 %s498, %s496
      %s500 = smul.addr %s499, 8
      %s501 = scalar_lea.vmem %s13, %s500
      %p502 = scmp.lt.s32.totalorder %s29, 1
      %s503 = scalar_select %p502, %s29, 1
      %p504 = scmp.lt.s32.totalorder %s30, 0
      %s505 = scalar_select %p504, %s30, 0
      %s506 = sadd.s32 %s505, %s503
      %s507 = smul.addr %s506, 8
      %s508 = scalar_lea.vmem %s0, %s507
      %p509 = scmp.lt.s32.totalorder %s30, 0
      %s510 = scalar_select %p509, %s30, 0
      %s511 = smul.addr %s510, 8
      %s512 = scalar_lea.vmem %s9, %s511
      %p513 = scmp.lt.s32.totalorder %s30, 0
      %s514 = scalar_select %p513, %s30, 0
      %s515 = smul.addr %s514, 8
      %s516 = scalar_lea.vmem %s10, %s515
      %p517 = scmp.lt.s32.totalorder %s29, 1
      %s518 = scalar_select %p517, %s29, 1
      %p519 = scmp.lt.s32.totalorder %s30, 0
      %s520 = scalar_select %p519, %s30, 0
      %s521 = sadd.s32 %s520, %s518
      %s522 = smul.addr %s521, 8
      %s523 = scalar_lea.vmem %s11, %s522
      %p524 = scmp.lt.s32.totalorder %s29, 1
      %s525 = scalar_select %p524, %s29, 1
      %p526 = scmp.lt.s32.totalorder %s30, 0
      %s527 = scalar_select %p526, %s30, 0
      %s528 = sadd.s32 %s527, %s525
      %s529 = smul.addr %s528, 8
      %s530 = scalar_lea.vmem %s12, %s529
      %p531 = scmp.lt.s32.totalorder %s29, 1
      %s532 = scalar_select %p531, %s29, 1
      %p533 = scmp.lt.s32.totalorder %s30, 0
      %s534 = scalar_select %p533, %s30, 0
      %s535 = sadd.s32 %s534, %s532
      %s536 = smul.addr %s535, 8
      %s537 = scalar_lea.vmem %s13, %s536
      %v538 = vld [vmem:[%s508] sm:$0xff]
      %v539 = vld [vmem:[%s1] sm:$0xff]
      %v540 = vld [vmem:[%s1 + $0x8] sm:$0xff]
      %v541 = vld [vmem:[%s1 + $0x10] sm:$0xff]
      %v542 = vld [vmem:[%s1 + $0x18] sm:$0xff]
      %v543 = vld [vmem:[%s1 + $0x20] sm:$0xff]
      %v544 = vld [vmem:[%s1 + $0x28] sm:$0xff]
      %v545 = vld [vmem:[%s1 + $0x30] sm:$0xff]
      %v546 = vld [vmem:[%s1 + $0x38] sm:$0xff]
      %v547 = vld [vmem:[%s1 + $0x40] sm:$0xff]
      %v548 = vld [vmem:[%s1 + $0x48] sm:$0xff]
      %v549 = vld [vmem:[%s1 + $0x50] sm:$0xff]
      %v550 = vld [vmem:[%s1 + $0x58] sm:$0xff]
      %v551 = vld [vmem:[%s1 + $0x60] sm:$0xff]
      %v552 = vld [vmem:[%s1 + $0x68] sm:$0xff]
      %v553 = vld [vmem:[%s1 + $0x70] sm:$0xff]
      %v554 = vld [vmem:[%s1 + $0x78] sm:$0xff]
      %v555 = vld [vmem:[%s2] sm:$0x1]
      %v557 = vperm.slane %v555, 0
      %559 = vmatpush.msra.mxu0 %v554
      %560 = vmatpush.msra.mxu0 %v553
      %561 = vmatpush.msra.mxu0 %v552
      %562 = vmatpush.msra.mxu0 %v551
      %563 = vmatpush.msra.mxu0 %v550
      %564 = vmatpush.msra.mxu0 %v549
      %565 = vmatpush.msra.mxu0 %v548
      %566 = vmatpush.msra.mxu0 %v547
      %567 = vmatpush.msra.mxu0 %v546
      %568 = vmatpush.msra.mxu0 %v545
      %569 = vmatpush.msra.mxu0 %v544
      %570 = vmatpush.msra.mxu0 %v543
      %571 = vmatpush.msra.mxu0 %v542
      %572 = vmatpush.msra.mxu0 %v541
      %573 = vmatpush.msra.mxu0 %v540
      %574 = vmatpush.msra.mxu0 %v539
      %575 = vmatmul.f32.gmra.mxu0 %v538
      %v576 = vpop.f32.mrf.mxu0
      %v577 = vadd.f32 %v557, %v576
      %578 = vdwg.mxu0
      %v579 = vmul.f32 %v577, %v577
      %580 = vadd.xlane.f32.xlu0 %v579
      %v581 = vpop.xlane.xlu0 %580
      %v582 = vrcp.pop 128.0
      %v583 = vmul.f32 128.0, %v582
      %v584 = vsub.f32 1.0, %v583
      %v585 = vmul.f32 %v582, %v584
      %v586 = vadd.f32 %v582, %v585
      %vm587 = vweird.f32 %v582
      %v588 = vsel %vm587, %v582, %v586
      %v589 = vmul.f32 %v581, %v588
      %v590 = vadd.f32 %v589, 1e-06
      %v591 = vrsqrt.pop %v590
      %v592 = vmul.f32 %v591, %v590
      %v593 = vmul.f32 %v592, %v591
      %v594 = vmul.f32 0.5, %v593
      %v595 = vsub.f32 1.5, %v594
      %v596 = vmul.f32 %v591, %v595
      %vm597 = vweird.f32 %v590
      %vm598 = vweird.f32 %v591
      %vm599 = vmor %vm597, %vm598
      %v600 = vsel %vm599, %v591, %v596
      %v601 = vmul.f32 %v577, %v600
      %v602 = vld [vmem:[%s7] sm:$0x1]
      %v604 = vperm.slane %v602, 0
      %v606 = vmul.f32 %v601, %v604
      %v607 = vld [vmem:[%s3] sm:$0xff]
      %v608 = vld [vmem:[%s3 + $0x8] sm:$0xff]
      %v609 = vld [vmem:[%s3 + $0x10] sm:$0xff]
      %v610 = vld [vmem:[%s3 + $0x18] sm:$0xff]
      %v611 = vld [vmem:[%s3 + $0x20] sm:$0xff]
      %v612 = vld [vmem:[%s3 + $0x28] sm:$0xff]
      %v613 = vld [vmem:[%s3 + $0x30] sm:$0xff]
      %v614 = vld [vmem:[%s3 + $0x38] sm:$0xff]
      %v615 = vld [vmem:[%s3 + $0x40] sm:$0xff]
      %v616 = vld [vmem:[%s3 + $0x48] sm:$0xff]
      %v617 = vld [vmem:[%s3 + $0x50] sm:$0xff]
      %v618 = vld [vmem:[%s3 + $0x58] sm:$0xff]
      %v619 = vld [vmem:[%s3 + $0x60] sm:$0xff]
      %v620 = vld [vmem:[%s3 + $0x68] sm:$0xff]
      %v621 = vld [vmem:[%s3 + $0x70] sm:$0xff]
      %v622 = vld [vmem:[%s3 + $0x78] sm:$0xff]
      %v623 = vld [vmem:[%s4] sm:$0x1]
      %v625 = vperm.slane %v623, 0
      %627 = vmatpush.msra.mxu0 %v622
      %628 = vmatpush.msra.mxu0 %v621
      %629 = vmatpush.msra.mxu0 %v620
      %630 = vmatpush.msra.mxu0 %v619
      %631 = vmatpush.msra.mxu0 %v618
      %632 = vmatpush.msra.mxu0 %v617
      %633 = vmatpush.msra.mxu0 %v616
      %634 = vmatpush.msra.mxu0 %v615
      %635 = vmatpush.msra.mxu0 %v614
      %636 = vmatpush.msra.mxu0 %v613
      %637 = vmatpush.msra.mxu0 %v612
      %638 = vmatpush.msra.mxu0 %v611
      %639 = vmatpush.msra.mxu0 %v610
      %640 = vmatpush.msra.mxu0 %v609
      %641 = vmatpush.msra.mxu0 %v608
      %642 = vmatpush.msra.mxu0 %v607
      %643 = vmatmul.f32.gmra.mxu0 %v538
      %v644 = vpop.f32.mrf.mxu0
      %v645 = vadd.f32 %v625, %v644
      %646 = vdwg.mxu0
      %v647 = vmul.f32 %v645, %v645
      %648 = vadd.xlane.f32.xlu0 %v647
      %v649 = vpop.xlane.xlu0 %648
      %v650 = vmul.f32 %v649, %v588
      %v651 = vadd.f32 %v650, 1e-06
      %v652 = vrsqrt.pop %v651
      %v653 = vmul.f32 %v652, %v651
      %v654 = vmul.f32 %v653, %v652
      %v655 = vmul.f32 0.5, %v654
      %v656 = vsub.f32 1.5, %v655
      %v657 = vmul.f32 %v652, %v656
      %vm658 = vweird.f32 %v651
      %vm659 = vweird.f32 %v652
      %vm660 = vmor %vm658, %vm659
      %v661 = vsel %vm660, %v652, %v657
      %v662 = vmul.f32 %v645, %v661
      %v663 = vld [vmem:[%s8] sm:$0x1]
      %v665 = vperm.slane %v663, 0
      %v667 = vmul.f32 %v662, %v665
      %v668 = vld [vmem:[%s5] sm:$0xff]
      %v669 = vld [vmem:[%s5 + $0x8] sm:$0xff]
      %v670 = vld [vmem:[%s5 + $0x10] sm:$0xff]
      %v671 = vld [vmem:[%s5 + $0x18] sm:$0xff]
      %v672 = vld [vmem:[%s5 + $0x20] sm:$0xff]
      %v673 = vld [vmem:[%s5 + $0x28] sm:$0xff]
      %v674 = vld [vmem:[%s5 + $0x30] sm:$0xff]
      %v675 = vld [vmem:[%s5 + $0x38] sm:$0xff]
      %v676 = vld [vmem:[%s5 + $0x40] sm:$0xff]
      %v677 = vld [vmem:[%s5 + $0x48] sm:$0xff]
      %v678 = vld [vmem:[%s5 + $0x50] sm:$0xff]
      %v679 = vld [vmem:[%s5 + $0x58] sm:$0xff]
      %v680 = vld [vmem:[%s5 + $0x60] sm:$0xff]
      %v681 = vld [vmem:[%s5 + $0x68] sm:$0xff]
      %v682 = vld [vmem:[%s5 + $0x70] sm:$0xff]
      %v683 = vld [vmem:[%s5 + $0x78] sm:$0xff]
      %v684 = vld [vmem:[%s6] sm:$0x1]
      %v686 = vperm.slane %v684, 0
      %688 = vmatpush.msra.mxu0 %v683
      %689 = vmatpush.msra.mxu0 %v682
      %690 = vmatpush.msra.mxu0 %v681
      %691 = vmatpush.msra.mxu0 %v680
      %692 = vmatpush.msra.mxu0 %v679
      %693 = vmatpush.msra.mxu0 %v678
      %694 = vmatpush.msra.mxu0 %v677
      %695 = vmatpush.msra.mxu0 %v676
      %696 = vmatpush.msra.mxu0 %v675
      %697 = vmatpush.msra.mxu0 %v674
      %698 = vmatpush.msra.mxu0 %v673
      %699 = vmatpush.msra.mxu0 %v672
      %700 = vmatpush.msra.mxu0 %v671
      %701 = vmatpush.msra.mxu0 %v670
      %702 = vmatpush.msra.mxu0 %v669
      %703 = vmatpush.msra.mxu0 %v668
      %704 = vmatmul.f32.gmra.mxu0 %v538
      %v705 = vpop.f32.mrf.mxu0
      %v706 = vadd.f32 %v686, %v705
      %707 = vdwg.mxu0
      %v708 = vld [vmem:[%s512] sm:$0xff]
      %v709 = vld [vmem:[%s516] sm:$0xff]
      %v710 = vmul.f32 %v606, %v708
      %711 = vrot.lane.b32.xlu0 %v606, 64
      %v712 = vpop.permute.xlu0 %711
      %v713 = vmul.f32 %v712, %v709
      %v714 = vadd.f32 %v710, %v713
      %715 = vst [vmem:[%s523] sm:$0xff] %v714
      %v716 = vmul.f32 %v667, %v708
      %717 = vrot.lane.b32.xlu0 %v667, 64
      %v718 = vpop.permute.xlu0 %717
      %v719 = vmul.f32 %v718, %v709
      %v720 = vadd.f32 %v716, %v719
      %721 = vst [vmem:[%s530] sm:$0xff] %v720
      %722 = vst [vmem:[%s537] sm:$0xff] %v706
      %p723 = scmp.lt.s32.totalorder %s29, 1
      %s724 = scalar_select %p723, %s29, 1
      %p725 = scmp.lt.s32.totalorder %s30, 0
      %s726 = scalar_select %p725, %s30, 0
      %s727 = sadd.s32 %s726, %s724
      %s728 = smul.addr %s727, 8
      %s729 = scalar_lea.vmem %s11, %s728
      %p730 = scmp.lt.s32.totalorder %s29, 1
      %s731 = scalar_select %p730, %s29, 1
      %p732 = scmp.lt.s32.totalorder %s30, 0
      %s733 = scalar_select %p732, %s30, 0
      %s734 = sadd.s32 %s733, %s731
      %s735 = smul.addr %s734, 8
      %s736 = scalar_lea.vmem %s12, %s735
      %p737 = scmp.lt.s32.totalorder %s29, 1
      %s738 = scalar_select %p737, %s29, 1
      %p739 = scmp.lt.s32.totalorder %s30, 0
      %s740 = scalar_select %p739, %s30, 0
      %s741 = sadd.s32 %s740, %s738
      %s742 = smul.addr %s741, 8
      %s743 = scalar_lea.vmem %s13, %s742
      // Predicated region
      $region65: #{self_attention_pallas.3} parent=63 // pred_check
        %p744 = pneg %p305
      $region66: #{self_attention_pallas.3} parent=63 // pred_check_branch
        %746 = sbr.rel (%p744) target = $region68
      $region67: #{self_attention_pallas.3} parent=63 // pred_region
        _
      $region68: #{self_attention_pallas.3} parent=63 // pred_fallthru
        _
      // Predicated region
      $region69: #{self_attention_pallas.3} parent=63 // pred_check
        %p747 = pneg %p333
      $region70: #{self_attention_pallas.3} parent=63 // pred_check_branch
        %749 = sbr.rel (%p747) target = $region72
      $region71: #{self_attention_pallas.3} parent=63 // pred_region
        _
      $region72: #{self_attention_pallas.3} parent=63 // pred_fallthru
        _
      // Predicated region
      $region73: #{self_attention_pallas.3} parent=63 // pred_check
        %p750 = pneg %p361
      $region74: #{self_attention_pallas.3} parent=63 // pred_check_branch
        %752 = sbr.rel (%p750) target = $region76
      $region75: #{self_attention_pallas.3} parent=63 // pred_region
        _
      $region76: #{self_attention_pallas.3} parent=63 // pred_fallthru
        _
    $region64: #{self_attention_pallas.3} parent=5 // pred_fallthru
      _
    %p753 = scmp.le.s32.totalorder 2, %s20
    // Predicated region
    $region77: #{self_attention_pallas.3} parent=5 // pred_check
      %p754 = pneg %p753
    $region78: #{self_attention_pallas.3} parent=5 // pred_check_branch
      %756 = sbr.rel (%p754) target = $region80
    $region79: #{self_attention_pallas.3} parent=5 // pred_region
      %s757 = ssub.s32 %s20, 2
      // Predicated region
      $region81: #{self_attention_pallas.3} parent=79 // pred_check
        %p758 = pneg %p311
      $region82: #{self_attention_pallas.3} parent=79 // pred_check_branch
        %760 = sbr.rel (%p758) target = $region84
      $region83: #{self_attention_pallas.3} parent=79 // pred_region
        %p761 = scmp.lt.s32.totalorder %s31, 1
        %s762 = scalar_select %p761, %s31, 1
        %p763 = scmp.lt.s32.totalorder %s32, 0
        %s764 = scalar_select %p763, %s32, 0
        %s765 = sadd.s32 %s764, %s762
        %s766 = smul.addr %s765, 8
        %s767 = scalar_lea.vmem %s11, %s766
      $region84: #{self_attention_pallas.3} parent=79 // pred_fallthru
        _
      // Predicated region
      $region85: #{self_attention_pallas.3} parent=79 // pred_check
        %p768 = pneg %p339
      $region86: #{self_attention_pallas.3} parent=79 // pred_check_branch
        %770 = sbr.rel (%p768) target = $region88
      $region87: #{self_attention_pallas.3} parent=79 // pred_region
        %p771 = scmp.lt.s32.totalorder %s31, 1
        %s772 = scalar_select %p771, %s31, 1
        %p773 = scmp.lt.s32.totalorder %s32, 0
        %s774 = scalar_select %p773, %s32, 0
        %s775 = sadd.s32 %s774, %s772
        %s776 = smul.addr %s775, 8
        %s777 = scalar_lea.vmem %s12, %s776
      $region88: #{self_attention_pallas.3} parent=79 // pred_fallthru
        _
      // Predicated region
      $region89: #{self_attention_pallas.3} parent=79 // pred_check
        %p778 = pneg %p367
      $region90: #{self_attention_pallas.3} parent=79 // pred_check_branch
        %780 = sbr.rel (%p778) target = $region92
      $region91: #{self_attention_pallas.3} parent=79 // pred_region
        %p781 = scmp.lt.s32.totalorder %s31, 1
        %s782 = scalar_select %p781, %s31, 1
        %p783 = scmp.lt.s32.totalorder %s32, 0
        %s784 = scalar_select %p783, %s32, 0
        %s785 = sadd.s32 %s784, %s782
        %s786 = smul.addr %s785, 8
        %s787 = scalar_lea.vmem %s13, %s786
      $region92: #{self_attention_pallas.3} parent=79 // pred_fallthru
        _
    $region80: #{self_attention_pallas.3} parent=5 // pred_fallthru
      _
  $region6: #{self_attention_pallas.3} parent=0 // loop_footer
    %s24 = sadd.s32 1, %s20
  $region7: #{self_attention_pallas.3} parent=0 // loop_footer_branch
    %19 = sbr.rel target = $region3
  $region8: #{self_attention_pallas.3} parent=0 // loop_exit
    _

</llo_original>
